<compile_context>
chip_gen: v5e
topology: v5e:2x2
jax: 0.10.0
libtpu: 0.0.40
codegen_flags: <defaults>
</compile_context>

<pallas_src>
from functools import partial

import numpy as np
import jax
import jax.numpy as jnp
from jax.experimental import pallas as pl
from jax.experimental.pallas import tpu as pltpu

LEAKY_DEFAULT = 0.01      # nn.LeakyReLU() default slope
GAT_NEG_SLOPE = 0.2       # selfGATConv negative_slope
VMEM_LIMIT = 32 * 1024 * 1024   # safe scoped-VMEM request on v5e/v6e/v7x


def _round_up(v, m):
    return ((v + m - 1) // m) * m


def _pick_tile(dim, max_tile, align):
    # max_tile is always a multiple of `align`
    return min(max_tile, _round_up(dim, align))


# ----------------------------------------------------------------------------
# Kernel 1: generic tiled (M,K)@(K,N) + bias [+ LeakyReLU]
# grid = (M/tm, N/tn, K/tk) with f32 VMEM accumulator; bf16 operands.
# Used for: masked GO linear (fc1) and the output head (N padded to 128).
# ----------------------------------------------------------------------------
def _matmul_bias_act(x, w, b, leaky_slope=None, *, tm=256, tn=512, tk=512,
                     compute_dtype=jnp.bfloat16):
    M, K = x.shape
    Kw, N = w.shape
    assert K == Kw

    tm_ = _pick_tile(M, tm, 8)
    tn_ = _pick_tile(N, tn, 128)
    tk_ = _pick_tile(K, tk, 128)
    Mp, Np, Kp = _round_up(M, tm_), _round_up(N, tn_), _round_up(K, tk_)

    xp = jnp.pad(x, ((0, Mp - M), (0, Kp - K))) if (Mp != M or Kp != K) else x
    wp = jnp.pad(w, ((0, Kp - K), (0, Np - N))) if (Kp != K or Np != N) else w
    bp = b.reshape(1, -1).astype(jnp.float32)
    if Np != N:
        bp = jnp.pad(bp, ((0, 0), (0, Np - N)))
    xp = xp.astype(compute_dtype)
    wp = wp.astype(compute_dtype)

    def kernel(x_ref, w_ref, b_ref, o_ref, acc_ref):
        @pl.when(pl.program_id(2) == 0)
        def _init():
            acc_ref[...] = jnp.zeros_like(acc_ref)

        acc_ref[...] += jnp.dot(x_ref[...], w_ref[...],
                                preferred_element_type=jnp.float32)

        @pl.when(pl.program_id(2) == pl.num_programs(2) - 1)
        def _done():
            y = acc_ref[...] + b_ref[...]
            if leaky_slope is not None:
                y = jnp.where(y > 0, y, leaky_slope * y)
            o_ref[...] = y

    out = pl.pallas_call(
        kernel,
        out_shape=jax.ShapeDtypeStruct((Mp, Np), jnp.float32),
        grid=(Mp // tm_, Np // tn_, Kp // tk_),
        in_specs=[pl.BlockSpec((tm_, tk_), lambda i, j, k: (i, k)),
                  pl.BlockSpec((tk_, tn_), lambda i, j, k: (k, j)),
                  pl.BlockSpec((1, tn_), lambda i, j, k: (0, j))],
        out_specs=pl.BlockSpec((tm_, tn_), lambda i, j, k: (i, j)),
        scratch_shapes=[pltpu.VMEM((tm_, tn_), jnp.float32)],
        compiler_params=pltpu.CompilerParams(
            dimension_semantics=("parallel", "parallel", "arbitrary"),
            vmem_limit_bytes=VMEM_LIMIT),
    )(xp, wp, bp)
    return out[:M, :N]


# ----------------------------------------------------------------------------
# Kernel 2: all gene subNets without the block-diagonal weight.
#   z[b, p]   = sum_tf x[b, tf, p] * W_tf[tf, p]        (elementwise + reduce)
#   y[b, g]   = leaky( sum_p z[b, p] * S[p, g] + b_g )  (segment-sum matmul)
# grid = (B/tb, G/tg, P/tp); P is the pipelined reduction axis.
# ----------------------------------------------------------------------------
def _subnet_forward(x, w_tf, seg, b_sub, *, tb=64, tg=256, tp=512):
    B, T, P = x.shape
    G = seg.shape[1]

    tp_ = _pick_tile(P, tp, 128)
    # keep the (tb, T, tp) f32 x-tile modest so double-buffering fits VMEM
    cap = max(8, ((4 * 1024 * 1024) // (T * tp_ * 4)) // 8 * 8)
    tb_ = min(_pick_tile(B, tb, 8), cap)
    tg_ = _pick_tile(G, tg, 128)
    Bp, Gp, Pp = _round_up(B, tb_), _round_up(G, tg_), _round_up(P, tp_)

    xp = jnp.pad(x, ((0, Bp - B), (0, 0), (0, Pp - P))) if (Bp != B or Pp != P) else x
    wtfp = jnp.pad(w_tf, ((0, 0), (0, Pp - P))) if Pp != P else w_tf
    segp = jnp.pad(seg, ((0, Pp - P), (0, Gp - G))) if (Pp != P or Gp != G) else seg
    bp = b_sub.reshape(1, -1).astype(jnp.float32)
    if Gp != G:
        bp = jnp.pad(bp, ((0, 0), (0, Gp - G)))
    seg_dtype = segp.dtype

    def kernel(x_ref, w_ref, s_ref, b_ref, o_ref, acc_ref):
        @pl.when(pl.program_id(2) == 0)
        def _init():
            acc_ref[...] = jnp.zeros_like(acc_ref)

        z = jnp.sum(x_ref[...] * w_ref[...][None, :, :], axis=1)      # (tb, tp)
        acc_ref[...] += jnp.dot(z.astype(seg_dtype), s_ref[...],
                                preferred_element_type=jnp.float32)

        @pl.when(pl.program_id(2) == pl.num_programs(2) - 1)
        def _done():
            y = acc_ref[...] + b_ref[...]
            o_ref[...] = jnp.where(y > 0, y, LEAKY_DEFAULT * y)

    out = pl.pallas_call(
        kernel,
        out_shape=jax.ShapeDtypeStruct((Bp, Gp), jnp.float32),
        grid=(Bp // tb_, Gp // tg_, Pp // tp_),
        in_specs=[pl.BlockSpec((tb_, T, tp_), lambda i, j, k: (i, 0, k)),
                  pl.BlockSpec((T, tp_), lambda i, j, k: (0, k)),
                  pl.BlockSpec((tp_, tg_), lambda i, j, k: (k, j)),
                  pl.BlockSpec((1, tg_), lambda i, j, k: (0, j))],
        out_specs=pl.BlockSpec((tb_, tg_), lambda i, j, k: (i, j)),
        scratch_shapes=[pltpu.VMEM((tb_, tg_), jnp.float32)],
        compiler_params=pltpu.CompilerParams(
            dimension_semantics=("parallel", "parallel", "arbitrary"),
            vmem_limit_bytes=VMEM_LIMIT),
    )(xp, wtfp, segp, bp)
    return out[:B, :G]


# ----------------------------------------------------------------------------
# Kernel 3: fused GAT layer over the GO graph (dense adjacency form).
# Per batch-tile block it fuses: (go_dim x H*D) feature transform, attention
# logits + LeakyReLU(0.2), adjacency-masked softmax over sources, mean
# aggregation (deg_inv), head mean, bias, and LeakyReLU(0.01).
# Input  h3 : (B, go_dim, N)   (free reshape of the fc1 output)
# Output    : (B, D, N)        == PyTorch permute(1,2,0).reshape layout.
# adj_t[src, dst] = 1 iff there is an edge src -> dst.
# ----------------------------------------------------------------------------
def _gat_forward(h3, gat_w, gat_att, gat_bias_col, adj_t, deg_inv_row,
                 *, heads, out_ch, tb=8):
    B, go_dim, N = h3.shape
    H, D = heads, out_ch

    # keep the per-head (tb, N, N) logits intermediate ~2 MiB
    cap = max(1, (2 * 1024 * 1024) // (N * N * 4))
    tb_ = max(1, min(tb, B, cap))
    Bp = _round_up(B, tb_)
    h3p = jnp.pad(h3, ((0, Bp - B), (0, 0), (0, 0))) if Bp != B else h3

    def kernel(h_ref, wg_ref, att_ref, bias_ref, adj_ref, dinv_ref, o_ref):
        h = h_ref[...]                      # (tb, go_dim, N)
        wg = wg_ref[...]                    # (go_dim, H*D)
        att = att_ref[...]                  # (H, 2*D)
        adjt = adj_ref[...]                 # (N, N)  adj_t[src, dst]
        dinv = dinv_ref[...]                # (1, N)  1 / in-degree of target

        acc = jnp.zeros((tb_, D, N), jnp.float32)
        for hh in range(H):
            # feature transform for head hh: fh[b, e, n] = sum_d h[b,d,n]*wg[d,hh*D+e]
            fh = jnp.zeros((tb_, D, N), jnp.float32)
            for d in range(go_dim):
                fh = fh + h[:, d:d + 1, :] * wg[d:d + 1, hh * D:(hh + 1) * D][:, :, None]

            a_dst = jnp.sum(fh * att[hh:hh + 1, :D][:, :, None], axis=1)   # (tb, N)
            a_src = jnp.sum(fh * att[hh:hh + 1, D:][:, :, None], axis=1)   # (tb, N)

            lg = a_src[:, :, None] + a_dst[:, None, :]                     # (tb, src, dst)
            lg = jnp.where(lg > 0, lg, GAT_NEG_SLOPE * lg)
            msk = jnp.where(adjt[None] > 0, lg, -1e30)
            m = jnp.max(msk, axis=1, keepdims=True)                        # over sources
            e = jnp.exp(msk - m) * adjt[None]
            s = jnp.sum(e, axis=1, keepdims=True)
            p = e * pl.reciprocal(jnp.where(s > 0, s, 1.0), approx=True)   # (tb, src, dst)

            # agg[b, e, i] = sum_j fh[b, e, j] * p[b, j, i]  (no transposes needed)
            acc = acc + jnp.einsum("bej,bji->bei", fh, p,
                                   preferred_element_type=jnp.float32)

        upd = acc * (dinv[:, None, :] * (1.0 / H)) + bias_ref[...][None]   # (tb, D, N)
        o_ref[...] = jnp.where(upd > 0, upd, LEAKY_DEFAULT * upd)

    out = pl.pallas_call(
        kernel,
        out_shape=jax.ShapeDtypeStruct((Bp, D, N), jnp.float32),
        grid=(Bp // tb_,),
        in_specs=[pl.BlockSpec((tb_, go_dim, N), lambda i: (i, 0, 0)),
                  pl.BlockSpec((go_dim, H * D), lambda i: (0, 0)),
                  pl.BlockSpec((H, 2 * D), lambda i: (0, 0)),
                  pl.BlockSpec((D, 1), lambda i: (0, 0)),
                  pl.BlockSpec((N, N), lambda i: (0, 0)),
                  pl.BlockSpec((1, N), lambda i: (0, 0))],
        out_specs=pl.BlockSpec((tb_, D, N), lambda i: (i, 0, 0)),
        compiler_params=pltpu.CompilerParams(
            dimension_semantics=("parallel",),
            vmem_limit_bytes=VMEM_LIMIT),
    )(h3p, gat_w, gat_att, gat_bias_col, adj_t, deg_inv_row)
    return out[:B]


# ----------------------------------------------------------------------------
# Parameter preparation (done ONCE): masking / transposes / layout permutes
# are folded here instead of being re-run every forward call.
# ----------------------------------------------------------------------------
def prepare_params(raw, *, out_ch):
    W_tf = np.concatenate(raw["sub_w"], axis=1)          # (num_tf, P_total)
    P_total = W_tf.shape[1]
    G = len(raw["sub_w"])
    S = np.zeros((P_total, G), np.float32)               # peak -> gene segments
    for g in range(G):
        S[raw["cut"][g]:raw["cut"][g + 1], g] = 1.0
    w_fc1_t = (raw["fc1_weight"] * raw["mask_rep"]).T    # masked + transposed once

    return {
        "w_tf": jnp.asarray(W_tf, jnp.float32),
        "seg": jnp.asarray(S, jnp.bfloat16),
        "b_sub": jnp.asarray(raw["sub_b"], jnp.float32),
        "w_fc1_t": jnp.asarray(w_fc1_t, jnp.bfloat16),
        "fc1_bias": jnp.asarray(raw["fc1_bias"], jnp.float32),
        "gat_w": jnp.asarray(raw["gat_weight"], jnp.float32),
        "gat_att": jnp.asarray(raw["gat_att"], jnp.float32),
        "gat_bias_col": jnp.asarray(raw["gat_bias"].reshape(out_ch, 1), jnp.float32),
        "adj_t": jnp.asarray(raw["adj"].T, jnp.float32),
        "deg_inv_row": jnp.asarray(raw["deg_inv"].reshape(1, -1), jnp.float32),
        "w_out_t": jnp.asarray(raw["out_w"].T, jnp.bfloat16),
        "out_b": jnp.asarray(raw["out_b"], jnp.float32),
    }


# ----------------------------------------------------------------------------
# Full forward pass.
# ----------------------------------------------------------------------------
@partial(jax.jit, static_argnames=("num_gos", "go_dim", "heads", "out_ch"))
def net_forward(x, params, *, num_gos, go_dim, heads, out_ch):
    B = x.shape[0]

    # gene subNets + cat_activate
    x_cat = _subnet_forward(x, params["w_tf"], params["seg"], params["b_sub"])

    # masked GO linear (fc1) + activate
    h = _matmul_bias_act(x_cat, params["w_fc1_t"], params["fc1_bias"],
                         leaky_slope=LEAKY_DEFAULT)           # (B, num_gos*go_dim)
    h3 = h.reshape(B, go_dim, num_gos)                        # free reshape

    # fused GAT (transform + attention + softmax + mean aggr + bias + LeakyReLU)
    x_act3 = _gat_forward(h3, params["gat_w"], params["gat_att"],
                          params["gat_bias_col"], params["adj_t"],
                          params["deg_inv_row"], heads=heads, out_ch=out_ch)
    x_act = x_act3.reshape(B, out_ch * num_gos)               # PyTorch layout (d*N + n)

    # TODO(synk): nn.Dropout() (gat_drop) is identity here (inference semantics).
    out = _matmul_bias_act(x_act, params["w_out_t"], params["out_b"],
                           leaky_slope=None)                  # (B, 7)
    return x_cat, x_act, out


# ----------------------------------------------------------------------------
# Pure-JAX reference mirroring the PyTorch forward (per-gene loop, f32).
# ----------------------------------------------------------------------------
def reference_forward(x, raw, *, num_gos, go_dim, heads, out_ch):
    def leaky(v, s):
        return jnp.where(v > 0, v, s * v)

    B = x.shape[0]
    cols = []
    for i in range(len(raw["sub_w"])):
        xs = x[:, :, raw["cut"][i]:raw["cut"][i + 1]].reshape(B, -1)
        cols.append(xs @ raw["sub_w"][i].reshape(-1) + raw["sub_b"][i])
    x_cat = leaky(jnp.stack(cols, axis=1), LEAKY_DEFAULT)

    h = leaky(x_cat @ (raw["fc1_weight"] * raw["mask_rep"]).T + raw["fc1_bias"],
              LEAKY_DEFAULT)
    nodes = jnp.transpose(h.reshape(B, go_dim, num_gos), (2, 0, 1))     # (N,B,go_dim)
    t = (nodes.reshape(-1, go_dim) @ raw["gat_weight"]).reshape(
        num_gos, B, heads, out_ch)
    att_dst = raw["gat_att"][:, :out_ch]
    att_src = raw["gat_att"][:, out_ch:]
    a_dst = jnp.einsum("nbhd,hd->nbh", t, att_dst)
    a_src = jnp.einsum("nbhd,hd->nbh", t, att_src)
    logits = leaky(a_dst[:, None] + a_src[None, :], GAT_NEG_SLOPE)      # (Ni,Nj,B,H)
    mask4 = raw["adj"][:, :, None, None]
    masked = jnp.where(mask4 > 0, logits, -1e30)
    m = masked.max(axis=1, keepdims=True)
    e = jnp.exp(masked - m) * mask4
    s = e.sum(axis=1, keepdims=True)
    p = e / jnp.where(s > 0, s, 1.0)
    agg = jnp.einsum("ijbh,jbhd->ibhd", p, t)
    agg = agg * raw["deg_inv"][:, :, None, None]
    upd = agg.mean(axis=2) + raw["gat_bias"]                            # (N,B,D)
    xg = jnp.transpose(upd, (1, 2, 0)).reshape(B, -1)
    x_act = leaky(xg, LEAKY_DEFAULT)
    out = x_act @ raw["out_w"].T + raw["out_b"]
    return x_cat, x_act, out


if __name__ == "__main__":
    # ---- small deterministic configuration --------------------------------
    B = 2
    num_tf = 4
    num_peaks = [3, 2, 4, 3, 2, 3, 4, 3]
    G = len(num_peaks)
    cut = [0] + [int(c) for c in np.cumsum(num_peaks)]
    P_total = cut[-1]
    num_gos = 8
    go_dim = 6
    heads, out_ch = 2, 4
    n_classes = 7

    rng = np.random.RandomState(0)
    sub_w = [(rng.randn(num_tf, p) * 0.2).astype(np.float32) for p in num_peaks]
    sub_b = (rng.randn(G) * 0.1).astype(np.float32)
    fc1_weight = (rng.randn(num_gos * go_dim, G) * 0.2).astype(np.float32)
    fc1_bias = (rng.randn(num_gos * go_dim) * 0.1).astype(np.float32)
    mask = (rng.rand(num_gos, G) > 0.3).astype(np.float32)
    mask_rep = np.repeat(mask, go_dim, axis=0)              # repeat_interleave dim 0
    gat_weight = (rng.randn(go_dim, heads * out_ch) * 0.3).astype(np.float32)
    gat_att = (rng.randn(heads, 2 * out_ch) * 0.3).astype(np.float32)
    gat_bias = (rng.randn(out_ch) * 0.1).astype(np.float32)
    out_w = (rng.randn(n_classes, num_gos * out_ch) * 0.2).astype(np.float32)
    out_b = (rng.randn(n_classes) * 0.1).astype(np.float32)

    # bidirectional ring graph over GO nodes (edge_index replacement)
    src = np.concatenate([np.arange(num_gos), np.arange(num_gos)])
    dst = np.concatenate([(np.arange(num_gos) + 1) % num_gos,
                          (np.arange(num_gos) - 1) % num_gos])
    adj = np.zeros((num_gos, num_gos), np.float32)
    adj[dst, src] = 1.0                                     # adj[target, source]
    deg = adj.sum(axis=1, keepdims=True)
    deg_inv = np.where(deg > 0, 1.0 / np.maximum(deg, 1.0), 0.0).astype(np.float32)

    raw = dict(sub_w=sub_w, sub_b=sub_b, cut=cut,
               fc1_weight=fc1_weight, fc1_bias=fc1_bias, mask_rep=mask_rep,
               gat_weight=gat_weight, gat_att=gat_att, gat_bias=gat_bias,
               out_w=out_w, out_b=out_b, adj=adj, deg_inv=deg_inv)
    params = prepare_params(raw, out_ch=out_ch)

    x = jax.random.normal(jax.random.PRNGKey(0), (B, num_tf, P_total),
                          dtype=jnp.float32)

    x_cat, x_act, out = net_forward(x, params, num_gos=num_gos, go_dim=go_dim,
                                    heads=heads, out_ch=out_ch)
    jax.block_until_ready((x_cat, x_act, out))

    # sanity check against the pure-JAX reference (f32; kernels use bf16 matmuls)
    r_cat, r_act, r_out = reference_forward(x, raw, num_gos=num_gos,
                                            go_dim=go_dim, heads=heads,
                                            out_ch=out_ch)
    np.testing.assert_allclose(np.asarray(x_cat), np.asarray(r_cat),
                               rtol=2e-2, atol=2e-2)
    np.testing.assert_allclose(np.asarray(x_act), np.asarray(r_act),
                               rtol=2e-2, atol=2e-2)
    np.testing.assert_allclose(np.asarray(out), np.asarray(r_out),
                               rtol=2e-2, atol=2e-2)

    print("KERNEL_OK")
</pallas_src>

<mosaic_0001>
module attributes {stable_mosaic.version = 11 : i64} {
  func.func @kernel(%arg0: i32, %arg1: i32, %arg2: i32, %arg3: memref<8x4x128xf32, #tpu.memory_space<vmem>>, %arg4: memref<4x128xf32, #tpu.memory_space<vmem>>, %arg5: memref<128x128xbf16, #tpu.memory_space<vmem>>, %arg6: memref<1x128xf32, #tpu.memory_space<vmem>>, %arg7: memref<8x128xf32, #tpu.memory_space<vmem>>, %arg8: memref<8x128xf32, #tpu.memory_space<vmem>>) attributes {dimension_semantics = [#tpu.dimension_semantics<parallel>, #tpu.dimension_semantics<parallel>, #tpu.dimension_semantics<arbitrary>], iteration_bounds = array<i64: 1, 1, 1>, scalar_prefetch = 0 : i64, scratch_operands = 1 : i64, tpu.core_type = #tpu.core_type<tc>, window_params = [{transform_indices = @transform_0, window_bounds = array<i64: 8, 4, 128>}, {transform_indices = @transform_1, window_bounds = array<i64: 4, 128>}, {transform_indices = @transform_2, window_bounds = array<i64: 128, 128>}, {transform_indices = @transform_3, window_bounds = array<i64: 1, 128>}, {transform_indices = @transform_4, window_bounds = array<i64: 8, 128>}]} {
    %c0_i32 = arith.constant 0 : i32
    %0 = arith.cmpi eq, %arg2, %c0_i32 : i32
    %1 = arith.extui %0 : i1 to i32
    %c0_i32_0 = arith.constant 0 : i32
    %2 = arith.cmpi ne, %1, %c0_i32_0 : i32
    scf.if %2 {
      %cst_14 = arith.constant 0.000000e+00 : f32
      %18 = vector.broadcast %cst_14 : f32 to vector<8x128xf32>
      %c0_15 = arith.constant 0 : index
      %c0_16 = arith.constant 0 : index
      %19 = vector.load %arg8[%c0_15, %c0_16] : memref<8x128xf32, #tpu.memory_space<vmem>>, vector<8x128xf32>
      tpu.vector_store %arg8[%c0_15, %c0_16], %18 {strides = array<i32>} : memref<8x128xf32, #tpu.memory_space<vmem>>, vector<8x128xf32>,
    } else {
    }
    %c0 = arith.constant 0 : index
    %c0_1 = arith.constant 0 : index
    %c0_2 = arith.constant 0 : index
    %3 = vector.load %arg3[%c0, %c0_1, %c0_2] : memref<8x4x128xf32, #tpu.memory_space<vmem>>, vector<8x4x128xf32>
    %c0_3 = arith.constant 0 : index
    %c0_4 = arith.constant 0 : index
    %4 = vector.load %arg4[%c0_3, %c0_4] : memref<4x128xf32, #tpu.memory_space<vmem>>, vector<4x128xf32>
    %5 = vector.shape_cast %4 : vector<4x128xf32> to vector<1x4x128xf32>
    %6 = vector.broadcast %5 : vector<1x4x128xf32> to vector<8x4x128xf32>
    %7 = arith.mulf %3, %6 : vector<8x4x128xf32>
    %cst = arith.constant dense<0.000000e+00> : vector<8x128xf32>
    %8 = vector.multi_reduction <add>, %7, %cst [1] : vector<8x4x128xf32> to vector<8x128xf32>
    %c0_5 = arith.constant 0 : index
    %c0_6 = arith.constant 0 : index
    %9 = vector.load %arg8[%c0_5, %c0_6] : memref<8x128xf32, #tpu.memory_space<vmem>>, vector<8x128xf32>
    %10 = arith.truncf %8 : vector<8x128xf32> to vector<8x128xbf16>
    %c0_7 = arith.constant 0 : index
    %c0_8 = arith.constant 0 : index
    %11 = vector.load %arg5[%c0_7, %c0_8] : memref<128x128xbf16, #tpu.memory_space<vmem>>, vector<128x128xbf16>
    %cst_9 = arith.constant dense<0.000000e+00> : vector<8x128xf32>
    %12 = tpu.matmul %10, %11, %cst_9 {dimension_numbers = #tpu.dot_dimension_numbers<[1], [0], [0], [1], [0, 0, 1, 1], [], []>} : vector<8x128xbf16>, vector<128x128xbf16>, vector<8x128xf32> -> vector<8x128xf32>
    %13 = arith.addf %9, %12 : vector<8x128xf32>
    %c0_10 = arith.constant 0 : index
    %c0_11 = arith.constant 0 : index
    %14 = vector.load %arg8[%c0_10, %c0_11] : memref<8x128xf32, #tpu.memory_space<vmem>>, vector<8x128xf32>
    tpu.vector_store %arg8[%c0_10, %c0_11], %13 {strides = array<i32>} : memref<8x128xf32, #tpu.memory_space<vmem>>, vector<8x128xf32>,
    %c0_i32_12 = arith.constant 0 : i32
    %15 = arith.cmpi eq, %arg2, %c0_i32_12 : i32
    %16 = arith.extui %15 : i1 to i32
    %c0_i32_13 = arith.constant 0 : i32
    %17 = arith.cmpi ne, %16, %c0_i32_13 : i32
    scf.if %17 {
      %c0_14 = arith.constant 0 : index
      %c0_15 = arith.constant 0 : index
      %18 = vector.load %arg8[%c0_14, %c0_15] : memref<8x128xf32, #tpu.memory_space<vmem>>, vector<8x128xf32>
      %c0_16 = arith.constant 0 : index
      %c0_17 = arith.constant 0 : index
      %19 = vector.load %arg6[%c0_16, %c0_17] : memref<1x128xf32, #tpu.memory_space<vmem>>, vector<1x128xf32>
      %20 = vector.broadcast %19 : vector<1x128xf32> to vector<8x128xf32>
      %21 = arith.addf %18, %20 : vector<8x128xf32>
      %cst_18 = arith.constant 0.000000e+00 : f32
      %22 = vector.broadcast %cst_18 : f32 to vector<8x128xf32>
      %23 = arith.cmpf ogt, %21, %22 : vector<8x128xf32>
      %cst_19 = arith.constant 0.00999999977 : f32
      %24 = vector.broadcast %cst_19 : f32 to vector<8x128xf32>
      %25 = arith.mulf %24, %21 : vector<8x128xf32>
      %26 = arith.select %23, %21, %25 : vector<8x128xi1>, vector<8x128xf32>
      %c0_20 = arith.constant 0 : index
      %c0_21 = arith.constant 0 : index
      %27 = vector.load %arg7[%c0_20, %c0_21] : memref<8x128xf32, #tpu.memory_space<vmem>>, vector<8x128xf32>
      tpu.vector_store %arg7[%c0_20, %c0_21], %26 {strides = array<i32>} : memref<8x128xf32, #tpu.memory_space<vmem>>, vector<8x128xf32>,
    } else {
    }
    return
  }
  func.func @transform_0(%arg0: i32, %arg1: i32, %arg2: i32) -> (i32, i32, i32) {
    %c0_i32 = arith.constant 0 : i32
    %c0_i32_0 = arith.constant 0 : i32
    return %arg0, %c0_i32, %arg2 : i32, i32, i32
  }
  func.func @transform_1(%arg0: i32, %arg1: i32, %arg2: i32) -> (i32, i32) {
    %c0_i32 = arith.constant 0 : i32
    %c0_i32_0 = arith.constant 0 : i32
    return %c0_i32, %arg2 : i32, i32
  }
  func.func @transform_2(%arg0: i32, %arg1: i32, %arg2: i32) -> (i32, i32) {
    %c0_i32 = arith.constant 0 : i32
    return %arg2, %arg1 : i32, i32
  }
  func.func @transform_3(%arg0: i32, %arg1: i32, %arg2: i32) -> (i32, i32) {
    %c0_i32 = arith.constant 0 : i32
    %c0_i32_0 = arith.constant 0 : i32
    return %c0_i32, %arg1 : i32, i32
  }
  func.func @transform_4(%arg0: i32, %arg1: i32, %arg2: i32) -> (i32, i32) {
    %c0_i32 = arith.constant 0 : i32
    return %arg0, %arg1 : i32, i32
  }
}

module attributes {stable_mosaic.version = 11 : i64} {
  func.func @kernel(%arg0: i32, %arg1: i32, %arg2: i32, %arg3: memref<8x128xbf16, #tpu.memory_space<vmem>>, %arg4: memref<128x128xbf16, #tpu.memory_space<vmem>>, %arg5: memref<1x128xf32, #tpu.memory_space<vmem>>, %arg6: memref<8x128xf32, #tpu.memory_space<vmem>>, %arg7: memref<8x128xf32, #tpu.memory_space<vmem>>) attributes {dimension_semantics = [#tpu.dimension_semantics<parallel>, #tpu.dimension_semantics<parallel>, #tpu.dimension_semantics<arbitrary>], iteration_bounds = array<i64: 1, 1, 1>, scalar_prefetch = 0 : i64, scratch_operands = 1 : i64, tpu.core_type = #tpu.core_type<tc>, window_params = [{transform_indices = @transform_0, window_bounds = array<i64: 8, 128>}, {transform_indices = @transform_1, window_bounds = array<i64: 128, 128>}, {transform_indices = @transform_2, window_bounds = array<i64: 1, 128>}, {transform_indices = @transform_3, window_bounds = array<i64: 8, 128>}]} {
    %c0_i32 = arith.constant 0 : i32
    %0 = arith.cmpi eq, %arg2, %c0_i32 : i32
    %1 = arith.extui %0 : i1 to i32
    %c0_i32_0 = arith.constant 0 : i32
    %2 = arith.cmpi ne, %1, %c0_i32_0 : i32
    scf.if %2 {
      %cst_10 = arith.constant 0.000000e+00 : f32
      %12 = vector.broadcast %cst_10 : f32 to vector<8x128xf32>
      %c0_11 = arith.constant 0 : index
      %c0_12 = arith.constant 0 : index
      %13 = vector.load %arg7[%c0_11, %c0_12] : memref<8x128xf32, #tpu.memory_space<vmem>>, vector<8x128xf32>
      tpu.vector_store %arg7[%c0_11, %c0_12], %12 {strides = array<i32>} : memref<8x128xf32, #tpu.memory_space<vmem>>, vector<8x128xf32>,
    } else {
    }
    %c0 = arith.constant 0 : index
    %c0_1 = arith.constant 0 : index
    %3 = vector.load %arg7[%c0, %c0_1] : memref<8x128xf32, #tpu.memory_space<vmem>>, vector<8x128xf32>
    %c0_2 = arith.constant 0 : index
    %c0_3 = arith.constant 0 : index
    %4 = vector.load %arg3[%c0_2, %c0_3] : memref<8x128xbf16, #tpu.memory_space<vmem>>, vector<8x128xbf16>
    %c0_4 = arith.constant 0 : index
    %c0_5 = arith.constant 0 : index
    %5 = vector.load %arg4[%c0_4, %c0_5] : memref<128x128xbf16, #tpu.memory_space<vmem>>, vector<128x128xbf16>
    %cst = arith.constant dense<0.000000e+00> : vector<8x128xf32>
    %6 = tpu.matmul %4, %5, %cst {dimension_numbers = #tpu.dot_dimension_numbers<[1], [0], [0], [1], [0, 0, 1, 1], [], []>} : vector<8x128xbf16>, vector<128x128xbf16>, vector<8x128xf32> -> vector<8x128xf32>
    %7 = arith.addf %3, %6 : vector<8x128xf32>
    %c0_6 = arith.constant 0 : index
    %c0_7 = arith.constant 0 : index
    %8 = vector.load %arg7[%c0_6, %c0_7] : memref<8x128xf32, #tpu.memory_space<vmem>>, vector<8x128xf32>
    tpu.vector_store %arg7[%c0_6, %c0_7], %7 {strides = array<i32>} : memref<8x128xf32, #tpu.memory_space<vmem>>, vector<8x128xf32>,
    %c0_i32_8 = arith.constant 0 : i32
    %9 = arith.cmpi eq, %arg2, %c0_i32_8 : i32
    %10 = arith.extui %9 : i1 to i32
    %c0_i32_9 = arith.constant 0 : i32
    %11 = arith.cmpi ne, %10, %c0_i32_9 : i32
    scf.if %11 {
      %c0_10 = arith.constant 0 : index
      %c0_11 = arith.constant 0 : index
      %12 = vector.load %arg7[%c0_10, %c0_11] : memref<8x128xf32, #tpu.memory_space<vmem>>, vector<8x128xf32>
      %c0_12 = arith.constant 0 : index
      %c0_13 = arith.constant 0 : index
      %13 = vector.load %arg5[%c0_12, %c0_13] : memref<1x128xf32, #tpu.memory_space<vmem>>, vector<1x128xf32>
      %14 = vector.broadcast %13 : vector<1x128xf32> to vector<8x128xf32>
      %15 = arith.addf %12, %14 : vector<8x128xf32>
      %cst_14 = arith.constant 0.000000e+00 : f32
      %16 = vector.broadcast %cst_14 : f32 to vector<8x128xf32>
      %17 = arith.cmpf ogt, %15, %16 : vector<8x128xf32>
      %cst_15 = arith.constant 0.00999999977 : f32
      %18 = vector.broadcast %cst_15 : f32 to vector<8x128xf32>
      %19 = arith.mulf %18, %15 : vector<8x128xf32>
      %20 = arith.select %17, %15, %19 : vector<8x128xi1>, vector<8x128xf32>
      %c0_16 = arith.constant 0 : index
      %c0_17 = arith.constant 0 : index
      %21 = vector.load %arg6[%c0_16, %c0_17] : memref<8x128xf32, #tpu.memory_space<vmem>>, vector<8x128xf32>
      tpu.vector_store %arg6[%c0_16, %c0_17], %20 {strides = array<i32>} : memref<8x128xf32, #tpu.memory_space<vmem>>, vector<8x128xf32>,
    } else {
    }
    return
  }
  func.func @transform_0(%arg0: i32, %arg1: i32, %arg2: i32) -> (i32, i32) {
    %c0_i32 = arith.constant 0 : i32
    return %arg0, %arg2 : i32, i32
  }
  func.func @transform_1(%arg0: i32, %arg1: i32, %arg2: i32) -> (i32, i32) {
    %c0_i32 = arith.constant 0 : i32
    return %arg2, %arg1 : i32, i32
  }
  func.func @transform_2(%arg0: i32, %arg1: i32, %arg2: i32) -> (i32, i32) {
    %c0_i32 = arith.constant 0 : i32
    %c0_i32_0 = arith.constant 0 : i32
    return %c0_i32, %arg1 : i32, i32
  }
  func.func @transform_3(%arg0: i32, %arg1: i32, %arg2: i32) -> (i32, i32) {
    %c0_i32 = arith.constant 0 : i32
    return %arg0, %arg1 : i32, i32
  }
}

module attributes {stable_mosaic.version = 11 : i64} {
  func.func @kernel(%arg0: i32, %arg1: memref<2x6x8xf32, #tpu.memory_space<vmem>>, %arg2: memref<6x8xf32, #tpu.memory_space<vmem>>, %arg3: memref<2x8xf32, #tpu.memory_space<vmem>>, %arg4: memref<4x1xf32, #tpu.memory_space<vmem>>, %arg5: memref<8x8xf32, #tpu.memory_space<vmem>>, %arg6: memref<1x8xf32, #tpu.memory_space<vmem>>, %arg7: memref<2x4x8xf32, #tpu.memory_space<vmem>>) attributes {dimension_semantics = [#tpu.dimension_semantics<parallel>], iteration_bounds = array<i64: 1>, scalar_prefetch = 0 : i64, scratch_operands = 0 : i64, tpu.core_type = #tpu.core_type<tc>, window_params = [{transform_indices = @transform_0, window_bounds = array<i64: 2, 6, 8>}, {pipeline_mode = #tpu.pipeline_mode<synchronous>, transform_indices = @transform_1, window_bounds = array<i64: 6, 8>}, {pipeline_mode = #tpu.pipeline_mode<synchronous>, transform_indices = @transform_2, window_bounds = array<i64: 2, 8>}, {pipeline_mode = #tpu.pipeline_mode<synchronous>, transform_indices = @transform_3, window_bounds = array<i64: 4, 1>}, {pipeline_mode = #tpu.pipeline_mode<synchronous>, transform_indices = @transform_4, window_bounds = array<i64: 8, 8>}, {pipeline_mode = #tpu.pipeline_mode<synchronous>, transform_indices = @transform_5, window_bounds = array<i64: 1, 8>}, {transform_indices = @transform_6, window_bounds = array<i64: 2, 4, 8>}]} {
    %c0 = arith.constant 0 : index
    %c0_0 = arith.constant 0 : index
    %c0_1 = arith.constant 0 : index
    %0 = vector.load %arg1[%c0, %c0_0, %c0_1] : memref<2x6x8xf32, #tpu.memory_space<vmem>>, vector<2x6x8xf32>
    %c0_2 = arith.constant 0 : index
    %c0_3 = arith.constant 0 : index
    %1 = vector.load %arg2[%c0_2, %c0_3] : memref<6x8xf32, #tpu.memory_space<vmem>>, vector<6x8xf32>
    %c0_4 = arith.constant 0 : index
    %c0_5 = arith.constant 0 : index
    %2 = vector.load %arg3[%c0_4, %c0_5] : memref<2x8xf32, #tpu.memory_space<vmem>>, vector<2x8xf32>
    %c0_6 = arith.constant 0 : index
    %c0_7 = arith.constant 0 : index
    %3 = vector.load %arg5[%c0_6, %c0_7] : memref<8x8xf32, #tpu.memory_space<vmem>>, vector<8x8xf32>
    %c0_8 = arith.constant 0 : index
    %c0_9 = arith.constant 0 : index
    %4 = vector.load %arg6[%c0_8, %c0_9] : memref<1x8xf32, #tpu.memory_space<vmem>>, vector<1x8xf32>
    %cst = arith.constant 0.000000e+00 : f32
    %5 = vector.broadcast %cst : f32 to vector<2x4x8xf32>
    %cst_10 = arith.constant 0.000000e+00 : f32
    %6 = vector.broadcast %cst_10 : f32 to vector<2x4x8xf32>
    %7 = vector.extract_strided_slice %0 {offsets = [0, 0, 0], sizes = [2, 1, 8], strides = [1, 1, 1]} : vector<2x6x8xf32> to vector<2x1x8xf32>
    %8 = vector.extract_strided_slice %1 {offsets = [0, 0], sizes = [1, 4], strides = [1, 1]} : vector<6x8xf32> to vector<1x4xf32>
    %9 = vector.shape_cast %8 : vector<1x4xf32> to vector<1x4x1xf32>
    %10 = vector.broadcast %7 : vector<2x1x8xf32> to vector<2x4x8xf32>
    %11 = vector.broadcast %9 : vector<1x4x1xf32> to vector<2x4x8xf32>
    %12 = arith.mulf %10, %11 : vector<2x4x8xf32>
    %13 = arith.addf %6, %12 : vector<2x4x8xf32>
    %14 = vector.extract_strided_slice %0 {offsets = [0, 1, 0], sizes = [2, 1, 8], strides = [1, 1, 1]} : vector<2x6x8xf32> to vector<2x1x8xf32>
    %15 = vector.extract_strided_slice %1 {offsets = [1, 0], sizes = [1, 4], strides = [1, 1]} : vector<6x8xf32> to vector<1x4xf32>
    %16 = vector.shape_cast %15 : vector<1x4xf32> to vector<1x4x1xf32>
    %17 = vector.broadcast %14 : vector<2x1x8xf32> to vector<2x4x8xf32>
    %18 = vector.broadcast %16 : vector<1x4x1xf32> to vector<2x4x8xf32>
    %19 = arith.mulf %17, %18 : vector<2x4x8xf32>
    %20 = arith.addf %13, %19 : vector<2x4x8xf32>
    %21 = vector.extract_strided_slice %0 {offsets = [0, 2, 0], sizes = [2, 1, 8], strides = [1, 1, 1]} : vector<2x6x8xf32> to vector<2x1x8xf32>
    %22 = vector.extract_strided_slice %1 {offsets = [2, 0], sizes = [1, 4], strides = [1, 1]} : vector<6x8xf32> to vector<1x4xf32>
    %23 = vector.shape_cast %22 : vector<1x4xf32> to vector<1x4x1xf32>
    %24 = vector.broadcast %21 : vector<2x1x8xf32> to vector<2x4x8xf32>
    %25 = vector.broadcast %23 : vector<1x4x1xf32> to vector<2x4x8xf32>
    %26 = arith.mulf %24, %25 : vector<2x4x8xf32>
    %27 = arith.addf %20, %26 : vector<2x4x8xf32>
    %28 = vector.extract_strided_slice %0 {offsets = [0, 3, 0], sizes = [2, 1, 8], strides = [1, 1, 1]} : vector<2x6x8xf32> to vector<2x1x8xf32>
    %29 = vector.extract_strided_slice %1 {offsets = [3, 0], sizes = [1, 4], strides = [1, 1]} : vector<6x8xf32> to vector<1x4xf32>
    %30 = vector.shape_cast %29 : vector<1x4xf32> to vector<1x4x1xf32>
    %31 = vector.broadcast %28 : vector<2x1x8xf32> to vector<2x4x8xf32>
    %32 = vector.broadcast %30 : vector<1x4x1xf32> to vector<2x4x8xf32>
    %33 = arith.mulf %31, %32 : vector<2x4x8xf32>
    %34 = arith.addf %27, %33 : vector<2x4x8xf32>
    %35 = vector.extract_strided_slice %0 {offsets = [0, 4, 0], sizes = [2, 1, 8], strides = [1, 1, 1]} : vector<2x6x8xf32> to vector<2x1x8xf32>
    %36 = vector.extract_strided_slice %1 {offsets = [4, 0], sizes = [1, 4], strides = [1, 1]} : vector<6x8xf32> to vector<1x4xf32>
    %37 = vector.shape_cast %36 : vector<1x4xf32> to vector<1x4x1xf32>
    %38 = vector.broadcast %35 : vector<2x1x8xf32> to vector<2x4x8xf32>
    %39 = vector.broadcast %37 : vector<1x4x1xf32> to vector<2x4x8xf32>
    %40 = arith.mulf %38, %39 : vector<2x4x8xf32>
    %41 = arith.addf %34, %40 : vector<2x4x8xf32>
    %42 = vector.extract_strided_slice %0 {offsets = [0, 5, 0], sizes = [2, 1, 8], strides = [1, 1, 1]} : vector<2x6x8xf32> to vector<2x1x8xf32>
    %43 = vector.extract_strided_slice %1 {offsets = [5, 0], sizes = [1, 4], strides = [1, 1]} : vector<6x8xf32> to vector<1x4xf32>
    %44 = vector.shape_cast %43 : vector<1x4xf32> to vector<1x4x1xf32>
    %45 = vector.broadcast %42 : vector<2x1x8xf32> to vector<2x4x8xf32>
    %46 = vector.broadcast %44 : vector<1x4x1xf32> to vector<2x4x8xf32>
    %47 = arith.mulf %45, %46 : vector<2x4x8xf32>
    %48 = arith.addf %41, %47 : vector<2x4x8xf32>
    %49 = vector.extract_strided_slice %2 {offsets = [0, 0], sizes = [1, 4], strides = [1, 1]} : vector<2x8xf32> to vector<1x4xf32>
    %50 = vector.shape_cast %49 : vector<1x4xf32> to vector<1x4x1xf32>
    %51 = vector.broadcast %50 : vector<1x4x1xf32> to vector<2x4x8xf32>
    %52 = arith.mulf %48, %51 : vector<2x4x8xf32>
    %cst_11 = arith.constant dense<0.000000e+00> : vector<2x8xf32>
    %53 = vector.multi_reduction <add>, %52, %cst_11 [1] : vector<2x4x8xf32> to vector<2x8xf32>
    %54 = vector.extract_strided_slice %2 {offsets = [0, 4], sizes = [1, 4], strides = [1, 1]} : vector<2x8xf32> to vector<1x4xf32>
    %55 = vector.shape_cast %54 : vector<1x4xf32> to vector<1x4x1xf32>
    %56 = vector.broadcast %55 : vector<1x4x1xf32> to vector<2x4x8xf32>
    %57 = arith.mulf %48, %56 : vector<2x4x8xf32>
    %cst_12 = arith.constant dense<0.000000e+00> : vector<2x8xf32>
    %58 = vector.multi_reduction <add>, %57, %cst_12 [1] : vector<2x4x8xf32> to vector<2x8xf32>
    %59 = vector.shape_cast %58 : vector<2x8xf32> to vector<2x8x1xf32>
    %60 = vector.shape_cast %53 : vector<2x8xf32> to vector<2x1x8xf32>
    %61 = vector.broadcast %59 : vector<2x8x1xf32> to vector<2x8x8xf32>
    %62 = vector.broadcast %60 : vector<2x1x8xf32> to vector<2x8x8xf32>
    %63 = arith.addf %61, %62 : vector<2x8x8xf32>
    %cst_13 = arith.constant 0.000000e+00 : f32
    %64 = vector.broadcast %cst_13 : f32 to vector<2x8x8xf32>
    %65 = arith.cmpf ogt, %63, %64 : vector<2x8x8xf32>
    %cst_14 = arith.constant 2.000000e-01 : f32
    %66 = vector.broadcast %cst_14 : f32 to vector<2x8x8xf32>
    %67 = arith.mulf %66, %63 : vector<2x8x8xf32>
    %68 = arith.select %65, %63, %67 : vector<2x8x8xi1>, vector<2x8x8xf32>
    %69 = vector.shape_cast %3 : vector<8x8xf32> to vector<1x8x8xf32>
    %cst_15 = arith.constant 0.000000e+00 : f32
    %70 = vector.broadcast %cst_15 : f32 to vector<1x8x8xf32>
    %71 = arith.cmpf ogt, %69, %70 : vector<1x8x8xf32>
    %cst_16 = arith.constant -1.000000e+30 : f32
    %72 = vector.shape_cast %71 : vector<1x8x8xi1> to vector<1x8x8xi1>
    %73 = vector.broadcast %72 : vector<1x8x8xi1> to vector<2x8x8xi1>
    %74 = vector.broadcast %cst_16 : f32 to vector<2x8x8xf32>
    %75 = arith.select %73, %68, %74 : vector<2x8x8xi1>, vector<2x8x8xf32>
    %cst_17 = arith.constant dense<0xFF800000> : vector<2x8xf32>
    %76 = vector.multi_reduction <maximumf>, %75, %cst_17 [1] : vector<2x8x8xf32> to vector<2x8xf32>
    %77 = vector.shape_cast %76 : vector<2x8xf32> to vector<2x1x8xf32>
    %78 = vector.broadcast %77 : vector<2x1x8xf32> to vector<2x8x8xf32>
    %79 = arith.subf %75, %78 : vector<2x8x8xf32>
    %80 = math.exp %79 : vector<2x8x8xf32>
    %81 = vector.shape_cast %3 : vector<8x8xf32> to vector<1x8x8xf32>
    %82 = vector.broadcast %81 : vector<1x8x8xf32> to vector<2x8x8xf32>
    %83 = arith.mulf %80, %82 : vector<2x8x8xf32>
    %cst_18 = arith.constant dense<0.000000e+00> : vector<2x8xf32>
    %84 = vector.multi_reduction <add>, %83, %cst_18 [1] : vector<2x8x8xf32> to vector<2x8xf32>
    %85 = vector.shape_cast %84 : vector<2x8xf32> to vector<2x1x8xf32>
    %cst_19 = arith.constant 0.000000e+00 : f32
    %86 = vector.broadcast %cst_19 : f32 to vector<2x1x8xf32>
    %87 = arith.cmpf ogt, %85, %86 : vector<2x1x8xf32>
    %cst_20 = arith.constant 1.000000e+00 : f32
    %88 = vector.broadcast %cst_20 : f32 to vector<2x1x8xf32>
    %89 = arith.select %87, %85, %88 : vector<2x1x8xi1>, vector<2x1x8xf32>
    %90 = tpu.reciprocal %89 {approx = true} : vector<2x1x8xf32> -> vector<2x1x8xf32>
    %91 = vector.broadcast %90 : vector<2x1x8xf32> to vector<2x8x8xf32>
    %92 = arith.mulf %83, %91 : vector<2x8x8xf32>
    "tpu.trace_start"() <{level = 10 : i32, message = "bej,bji->bei"}> : () -> ()
    %cst_21 = arith.constant dense<0.000000e+00> : vector<2x4x8xf32>
    %93 = tpu.matmul %48, %92, %cst_21 {dimension_numbers = #tpu.dot_dimension_numbers<[2], [1], [1], [2], [0, 0, 0, 1, 1, 2], [0], [0]>} : vector<2x4x8xf32>, vector<2x8x8xf32>, vector<2x4x8xf32> -> vector<2x4x8xf32>
    "tpu.trace_stop"() : () -> ()
    %94 = arith.addf %5, %93 : vector<2x4x8xf32>
    %cst_22 = arith.constant 0.000000e+00 : f32
    %95 = vector.broadcast %cst_22 : f32 to vector<2x4x8xf32>
    %96 = vector.extract_strided_slice %0 {offsets = [0, 0, 0], sizes = [2, 1, 8], strides = [1, 1, 1]} : vector<2x6x8xf32> to vector<2x1x8xf32>
    %97 = vector.extract_strided_slice %1 {offsets = [0, 4], sizes = [1, 4], strides = [1, 1]} : vector<6x8xf32> to vector<1x4xf32>
    %98 = vector.shape_cast %97 : vector<1x4xf32> to vector<1x4x1xf32>
    %99 = vector.broadcast %96 : vector<2x1x8xf32> to vector<2x4x8xf32>
    %100 = vector.broadcast %98 : vector<1x4x1xf32> to vector<2x4x8xf32>
    %101 = arith.mulf %99, %100 : vector<2x4x8xf32>
    %102 = arith.addf %95, %101 : vector<2x4x8xf32>
    %103 = vector.extract_strided_slice %0 {offsets = [0, 1, 0], sizes = [2, 1, 8], strides = [1, 1, 1]} : vector<2x6x8xf32> to vector<2x1x8xf32>
    %104 = vector.extract_strided_slice %1 {offsets = [1, 4], sizes = [1, 4], strides = [1, 1]} : vector<6x8xf32> to vector<1x4xf32>
    %105 = vector.shape_cast %104 : vector<1x4xf32> to vector<1x4x1xf32>
    %106 = vector.broadcast %103 : vector<2x1x8xf32> to vector<2x4x8xf32>
    %107 = vector.broadcast %105 : vector<1x4x1xf32> to vector<2x4x8xf32>
    %108 = arith.mulf %106, %107 : vector<2x4x8xf32>
    %109 = arith.addf %102, %108 : vector<2x4x8xf32>
    %110 = vector.extract_strided_slice %0 {offsets = [0, 2, 0], sizes = [2, 1, 8], strides = [1, 1, 1]} : vector<2x6x8xf32> to vector<2x1x8xf32>
    %111 = vector.extract_strided_slice %1 {offsets = [2, 4], sizes = [1, 4], strides = [1, 1]} : vector<6x8xf32> to vector<1x4xf32>
    %112 = vector.shape_cast %111 : vector<1x4xf32> to vector<1x4x1xf32>
    %113 = vector.broadcast %110 : vector<2x1x8xf32> to vector<2x4x8xf32>
    %114 = vector.broadcast %112 : vector<1x4x1xf32> to vector<2x4x8xf32>
    %115 = arith.mulf %113, %114 : vector<2x4x8xf32>
    %116 = arith.addf %109, %115 : vector<2x4x8xf32>
    %117 = vector.extract_strided_slice %0 {offsets = [0, 3, 0], sizes = [2, 1, 8], strides = [1, 1, 1]} : vector<2x6x8xf32> to vector<2x1x8xf32>
    %118 = vector.extract_strided_slice %1 {offsets = [3, 4], sizes = [1, 4], strides = [1, 1]} : vector<6x8xf32> to vector<1x4xf32>
    %119 = vector.shape_cast %118 : vector<1x4xf32> to vector<1x4x1xf32>
    %120 = vector.broadcast %117 : vector<2x1x8xf32> to vector<2x4x8xf32>
    %121 = vector.broadcast %119 : vector<1x4x1xf32> to vector<2x4x8xf32>
    %122 = arith.mulf %120, %121 : vector<2x4x8xf32>
    %123 = arith.addf %116, %122 : vector<2x4x8xf32>
    %124 = vector.extract_strided_slice %0 {offsets = [0, 4, 0], sizes = [2, 1, 8], strides = [1, 1, 1]} : vector<2x6x8xf32> to vector<2x1x8xf32>
    %125 = vector.extract_strided_slice %1 {offsets = [4, 4], sizes = [1, 4], strides = [1, 1]} : vector<6x8xf32> to vector<1x4xf32>
    %126 = vector.shape_cast %125 : vector<1x4xf32> to vector<1x4x1xf32>
    %127 = vector.broadcast %124 : vector<2x1x8xf32> to vector<2x4x8xf32>
    %128 = vector.broadcast %126 : vector<1x4x1xf32> to vector<2x4x8xf32>
    %129 = arith.mulf %127, %128 : vector<2x4x8xf32>
    %130 = arith.addf %123, %129 : vector<2x4x8xf32>
    %131 = vector.extract_strided_slice %0 {offsets = [0, 5, 0], sizes = [2, 1, 8], strides = [1, 1, 1]} : vector<2x6x8xf32> to vector<2x1x8xf32>
    %132 = vector.extract_strided_slice %1 {offsets = [5, 4], sizes = [1, 4], strides = [1, 1]} : vector<6x8xf32> to vector<1x4xf32>
    %133 = vector.shape_cast %132 : vector<1x4xf32> to vector<1x4x1xf32>
    %134 = vector.broadcast %131 : vector<2x1x8xf32> to vector<2x4x8xf32>
    %135 = vector.broadcast %133 : vector<1x4x1xf32> to vector<2x4x8xf32>
    %136 = arith.mulf %134, %135 : vector<2x4x8xf32>
    %137 = arith.addf %130, %136 : vector<2x4x8xf32>
    %138 = vector.extract_strided_slice %2 {offsets = [1, 0], sizes = [1, 4], strides = [1, 1]} : vector<2x8xf32> to vector<1x4xf32>
    %139 = vector.shape_cast %138 : vector<1x4xf32> to vector<1x4x1xf32>
    %140 = vector.broadcast %139 : vector<1x4x1xf32> to vector<2x4x8xf32>
    %141 = arith.mulf %137, %140 : vector<2x4x8xf32>
    %cst_23 = arith.constant dense<0.000000e+00> : vector<2x8xf32>
    %142 = vector.multi_reduction <add>, %141, %cst_23 [1] : vector<2x4x8xf32> to vector<2x8xf32>
    %143 = vector.extract_strided_slice %2 {offsets = [1, 4], sizes = [1, 4], strides = [1, 1]} : vector<2x8xf32> to vector<1x4xf32>
    %144 = vector.shape_cast %143 : vector<1x4xf32> to vector<1x4x1xf32>
    %145 = vector.broadcast %144 : vector<1x4x1xf32> to vector<2x4x8xf32>
    %146 = arith.mulf %137, %145 : vector<2x4x8xf32>
    %cst_24 = arith.constant dense<0.000000e+00> : vector<2x8xf32>
    %147 = vector.multi_reduction <add>, %146, %cst_24 [1] : vector<2x4x8xf32> to vector<2x8xf32>
    %148 = vector.shape_cast %147 : vector<2x8xf32> to vector<2x8x1xf32>
    %149 = vector.shape_cast %142 : vector<2x8xf32> to vector<2x1x8xf32>
    %150 = vector.broadcast %148 : vector<2x8x1xf32> to vector<2x8x8xf32>
    %151 = vector.broadcast %149 : vector<2x1x8xf32> to vector<2x8x8xf32>
    %152 = arith.addf %150, %151 : vector<2x8x8xf32>
    %cst_25 = arith.constant 0.000000e+00 : f32
    %153 = vector.broadcast %cst_25 : f32 to vector<2x8x8xf32>
    %154 = arith.cmpf ogt, %152, %153 : vector<2x8x8xf32>
    %cst_26 = arith.constant 2.000000e-01 : f32
    %155 = vector.broadcast %cst_26 : f32 to vector<2x8x8xf32>
    %156 = arith.mulf %155, %152 : vector<2x8x8xf32>
    %157 = arith.select %154, %152, %156 : vector<2x8x8xi1>, vector<2x8x8xf32>
    %158 = vector.shape_cast %3 : vector<8x8xf32> to vector<1x8x8xf32>
    %cst_27 = arith.constant 0.000000e+00 : f32
    %159 = vector.broadcast %cst_27 : f32 to vector<1x8x8xf32>
    %160 = arith.cmpf ogt, %158, %159 : vector<1x8x8xf32>
    %cst_28 = arith.constant -1.000000e+30 : f32
    %161 = vector.shape_cast %160 : vector<1x8x8xi1> to vector<1x8x8xi1>
    %162 = vector.broadcast %161 : vector<1x8x8xi1> to vector<2x8x8xi1>
    %163 = vector.broadcast %cst_28 : f32 to vector<2x8x8xf32>
    %164 = arith.select %162, %157, %163 : vector<2x8x8xi1>, vector<2x8x8xf32>
    %cst_29 = arith.constant dense<0xFF800000> : vector<2x8xf32>
    %165 = vector.multi_reduction <maximumf>, %164, %cst_29 [1] : vector<2x8x8xf32> to vector<2x8xf32>
    %166 = vector.shape_cast %165 : vector<2x8xf32> to vector<2x1x8xf32>
    %167 = vector.broadcast %166 : vector<2x1x8xf32> to vector<2x8x8xf32>
    %168 = arith.subf %164, %167 : vector<2x8x8xf32>
    %169 = math.exp %168 : vector<2x8x8xf32>
    %170 = vector.shape_cast %3 : vector<8x8xf32> to vector<1x8x8xf32>
    %171 = vector.broadcast %170 : vector<1x8x8xf32> to vector<2x8x8xf32>
    %172 = arith.mulf %169, %171 : vector<2x8x8xf32>
    %cst_30 = arith.constant dense<0.000000e+00> : vector<2x8xf32>
    %173 = vector.multi_reduction <add>, %172, %cst_30 [1] : vector<2x8x8xf32> to vector<2x8xf32>
    %174 = vector.shape_cast %173 : vector<2x8xf32> to vector<2x1x8xf32>
    %cst_31 = arith.constant 0.000000e+00 : f32
    %175 = vector.broadcast %cst_31 : f32 to vector<2x1x8xf32>
    %176 = arith.cmpf ogt, %174, %175 : vector<2x1x8xf32>
    %cst_32 = arith.constant 1.000000e+00 : f32
    %177 = vector.broadcast %cst_32 : f32 to vector<2x1x8xf32>
    %178 = arith.select %176, %174, %177 : vector<2x1x8xi1>, vector<2x1x8xf32>
    %179 = tpu.reciprocal %178 {approx = true} : vector<2x1x8xf32> -> vector<2x1x8xf32>
    %180 = vector.broadcast %179 : vector<2x1x8xf32> to vector<2x8x8xf32>
    %181 = arith.mulf %172, %180 : vector<2x8x8xf32>
    "tpu.trace_start"() <{level = 10 : i32, message = "bej,bji->bei"}> : () -> ()
    %cst_33 = arith.constant dense<0.000000e+00> : vector<2x4x8xf32>
    %182 = tpu.matmul %137, %181, %cst_33 {dimension_numbers = #tpu.dot_dimension_numbers<[2], [1], [1], [2], [0, 0, 0, 1, 1, 2], [0], [0]>} : vector<2x4x8xf32>, vector<2x8x8xf32>, vector<2x4x8xf32> -> vector<2x4x8xf32>
    "tpu.trace_stop"() : () -> ()
    %183 = arith.addf %94, %182 : vector<2x4x8xf32>
    %184 = vector.shape_cast %4 : vector<1x8xf32> to vector<1x1x8xf32>
    %cst_34 = arith.constant 5.000000e-01 : f32
    %185 = vector.broadcast %cst_34 : f32 to vector<1x1x8xf32>
    %186 = arith.mulf %184, %185 : vector<1x1x8xf32>
    %187 = vector.broadcast %186 : vector<1x1x8xf32> to vector<2x4x8xf32>
    %188 = arith.mulf %183, %187 : vector<2x4x8xf32>
    %c0_35 = arith.constant 0 : index
    %c0_36 = arith.constant 0 : index
    %189 = vector.load %arg4[%c0_35, %c0_36] : memref<4x1xf32, #tpu.memory_space<vmem>>, vector<4x1xf32>
    %190 = vector.shape_cast %189 : vector<4x1xf32> to vector<1x4x1xf32>
    %191 = vector.broadcast %190 : vector<1x4x1xf32> to vector<2x4x8xf32>
    %192 = arith.addf %188, %191 : vector<2x4x8xf32>
    %cst_37 = arith.constant 0.000000e+00 : f32
    %193 = vector.broadcast %cst_37 : f32 to vector<2x4x8xf32>
    %194 = arith.cmpf ogt, %192, %193 : vector<2x4x8xf32>
    %cst_38 = arith.constant 0.00999999977 : f32
    %195 = vector.broadcast %cst_38 : f32 to vector<2x4x8xf32>
    %196 = arith.mulf %195, %192 : vector<2x4x8xf32>
    %197 = arith.select %194, %192, %196 : vector<2x4x8xi1>, vector<2x4x8xf32>
    %c0_39 = arith.constant 0 : index
    %c0_40 = arith.constant 0 : index
    %c0_41 = arith.constant 0 : index
    %198 = vector.load %arg7[%c0_39, %c0_40, %c0_41] : memref<2x4x8xf32, #tpu.memory_space<vmem>>, vector<2x4x8xf32>
    tpu.vector_store %arg7[%c0_39, %c0_40, %c0_41], %197 {strides = array<i32>} : memref<2x4x8xf32, #tpu.memory_space<vmem>>, vector<2x4x8xf32>,
    return
  }
  func.func @transform_0(%arg0: i32) -> (i32, i32, i32) {
    %c0_i32 = arith.constant 0 : i32
    %c0_i32_0 = arith.constant 0 : i32
    %c0_i32_1 = arith.constant 0 : i32
    return %arg0, %c0_i32, %c0_i32_0 : i32, i32, i32
  }
  func.func @transform_1(%arg0: i32) -> (i32, i32) {
    %c0_i32 = arith.constant 0 : i32
    %c0_i32_0 = arith.constant 0 : i32
    %c0_i32_1 = arith.constant 0 : i32
    return %c0_i32, %c0_i32_0 : i32, i32
  }
  func.func @transform_2(%arg0: i32) -> (i32, i32) {
    %c0_i32 = arith.constant 0 : i32
    %c0_i32_0 = arith.constant 0 : i32
    %c0_i32_1 = arith.constant 0 : i32
    return %c0_i32, %c0_i32_0 : i32, i32
  }
  func.func @transform_3(%arg0: i32) -> (i32, i32) {
    %c0_i32 = arith.constant 0 : i32
    %c0_i32_0 = arith.constant 0 : i32
    %c0_i32_1 = arith.constant 0 : i32
    return %c0_i32, %c0_i32_0 : i32, i32
  }
  func.func @transform_4(%arg0: i32) -> (i32, i32) {
    %c0_i32 = arith.constant 0 : i32
    %c0_i32_0 = arith.constant 0 : i32
    %c0_i32_1 = arith.constant 0 : i32
    return %c0_i32, %c0_i32_0 : i32, i32
  }
  func.func @transform_5(%arg0: i32) -> (i32, i32) {
    %c0_i32 = arith.constant 0 : i32
    %c0_i32_0 = arith.constant 0 : i32
    %c0_i32_1 = arith.constant 0 : i32
    return %c0_i32, %c0_i32_0 : i32, i32
  }
  func.func @transform_6(%arg0: i32) -> (i32, i32, i32) {
    %c0_i32 = arith.constant 0 : i32
    %c0_i32_0 = arith.constant 0 : i32
    %c0_i32_1 = arith.constant 0 : i32
    return %arg0, %c0_i32, %c0_i32_0 : i32, i32, i32
  }
}

module attributes {stable_mosaic.version = 11 : i64} {
  func.func @kernel(%arg0: i32, %arg1: i32, %arg2: i32, %arg3: memref<8x128xbf16, #tpu.memory_space<vmem>>, %arg4: memref<128x128xbf16, #tpu.memory_space<vmem>>, %arg5: memref<1x128xf32, #tpu.memory_space<vmem>>, %arg6: memref<8x128xf32, #tpu.memory_space<vmem>>, %arg7: memref<8x128xf32, #tpu.memory_space<vmem>>) attributes {dimension_semantics = [#tpu.dimension_semantics<parallel>, #tpu.dimension_semantics<parallel>, #tpu.dimension_semantics<arbitrary>], iteration_bounds = array<i64: 1, 1, 1>, scalar_prefetch = 0 : i64, scratch_operands = 1 : i64, tpu.core_type = #tpu.core_type<tc>, window_params = [{transform_indices = @transform_0, window_bounds = array<i64: 8, 128>}, {transform_indices = @transform_1, window_bounds = array<i64: 128, 128>}, {transform_indices = @transform_2, window_bounds = array<i64: 1, 128>}, {transform_indices = @transform_3, window_bounds = array<i64: 8, 128>}]} {
    %c0_i32 = arith.constant 0 : i32
    %0 = arith.cmpi eq, %arg2, %c0_i32 : i32
    %1 = arith.extui %0 : i1 to i32
    %c0_i32_0 = arith.constant 0 : i32
    %2 = arith.cmpi ne, %1, %c0_i32_0 : i32
    scf.if %2 {
      %cst_10 = arith.constant 0.000000e+00 : f32
      %12 = vector.broadcast %cst_10 : f32 to vector<8x128xf32>
      %c0_11 = arith.constant 0 : index
      %c0_12 = arith.constant 0 : index
      %13 = vector.load %arg7[%c0_11, %c0_12] : memref<8x128xf32, #tpu.memory_space<vmem>>, vector<8x128xf32>
      tpu.vector_store %arg7[%c0_11, %c0_12], %12 {strides = array<i32>} : memref<8x128xf32, #tpu.memory_space<vmem>>, vector<8x128xf32>,
    } else {
    }
    %c0 = arith.constant 0 : index
    %c0_1 = arith.constant 0 : index
    %3 = vector.load %arg7[%c0, %c0_1] : memref<8x128xf32, #tpu.memory_space<vmem>>, vector<8x128xf32>
    %c0_2 = arith.constant 0 : index
    %c0_3 = arith.constant 0 : index
    %4 = vector.load %arg3[%c0_2, %c0_3] : memref<8x128xbf16, #tpu.memory_space<vmem>>, vector<8x128xbf16>
    %c0_4 = arith.constant 0 : index
    %c0_5 = arith.constant 0 : index
    %5 = vector.load %arg4[%c0_4, %c0_5] : memref<128x128xbf16, #tpu.memory_space<vmem>>, vector<128x128xbf16>
    %cst = arith.constant dense<0.000000e+00> : vector<8x128xf32>
    %6 = tpu.matmul %4, %5, %cst {dimension_numbers = #tpu.dot_dimension_numbers<[1], [0], [0], [1], [0, 0, 1, 1], [], []>} : vector<8x128xbf16>, vector<128x128xbf16>, vector<8x128xf32> -> vector<8x128xf32>
    %7 = arith.addf %3, %6 : vector<8x128xf32>
    %c0_6 = arith.constant 0 : index
    %c0_7 = arith.constant 0 : index
    %8 = vector.load %arg7[%c0_6, %c0_7] : memref<8x128xf32, #tpu.memory_space<vmem>>, vector<8x128xf32>
    tpu.vector_store %arg7[%c0_6, %c0_7], %7 {strides = array<i32>} : memref<8x128xf32, #tpu.memory_space<vmem>>, vector<8x128xf32>,
    %c0_i32_8 = arith.constant 0 : i32
    %9 = arith.cmpi eq, %arg2, %c0_i32_8 : i32
    %10 = arith.extui %9 : i1 to i32
    %c0_i32_9 = arith.constant 0 : i32
    %11 = arith.cmpi ne, %10, %c0_i32_9 : i32
    scf.if %11 {
      %c0_10 = arith.constant 0 : index
      %c0_11 = arith.constant 0 : index
      %12 = vector.load %arg7[%c0_10, %c0_11] : memref<8x128xf32, #tpu.memory_space<vmem>>, vector<8x128xf32>
      %c0_12 = arith.constant 0 : index
      %c0_13 = arith.constant 0 : index
      %13 = vector.load %arg5[%c0_12, %c0_13] : memref<1x128xf32, #tpu.memory_space<vmem>>, vector<1x128xf32>
      %14 = vector.broadcast %13 : vector<1x128xf32> to vector<8x128xf32>
      %15 = arith.addf %12, %14 : vector<8x128xf32>
      %c0_14 = arith.constant 0 : index
      %c0_15 = arith.constant 0 : index
      %16 = vector.load %arg6[%c0_14, %c0_15] : memref<8x128xf32, #tpu.memory_space<vmem>>, vector<8x128xf32>
      tpu.vector_store %arg6[%c0_14, %c0_15], %15 {strides = array<i32>} : memref<8x128xf32, #tpu.memory_space<vmem>>, vector<8x128xf32>,
    } else {
    }
    return
  }
  func.func @transform_0(%arg0: i32, %arg1: i32, %arg2: i32) -> (i32, i32) {
    %c0_i32 = arith.constant 0 : i32
    return %arg0, %arg2 : i32, i32
  }
  func.func @transform_1(%arg0: i32, %arg1: i32, %arg2: i32) -> (i32, i32) {
    %c0_i32 = arith.constant 0 : i32
    return %arg2, %arg1 : i32, i32
  }
  func.func @transform_2(%arg0: i32, %arg1: i32, %arg2: i32) -> (i32, i32) {
    %c0_i32 = arith.constant 0 : i32
    %c0_i32_0 = arith.constant 0 : i32
    return %c0_i32, %arg1 : i32, i32
  }
  func.func @transform_3(%arg0: i32, %arg1: i32, %arg2: i32) -> (i32, i32) {
    %c0_i32 = arith.constant 0 : i32
    return %arg0, %arg1 : i32, i32
  }
}

</mosaic_0001>

<llo_original>
// kernel: net_forward.4
$region0: #{net_forward.4}
  #allocation0 [shape = 'u32[]', space=smem, size = 0x4, offset = 0x4, fixed_abs, tag = 'smem constant byte address 0x4 - core index']
  #allocation1 [shape = 'u32[72,128]{1,0:T(1,128)}', space=vmem, size = 0x9000, scoped, tag = 'internal scratch']
  #allocation2 [shape = 'f32[8,128]{1,0:T(8,128)}', space=vmem, size = 0x1000, scoped, tag = 'scratch operand']
  %s0 = inlined_call_operand.vmem [shape: f32[8,4,128], index: 0, kind: input, shape index: {}]
  %s1 = inlined_call_operand.vmem [shape: f32[4,128], index: 1, kind: input, shape index: {}]
  %s2 = inlined_call_operand.vmem [shape: bf16[128,128], index: 2, kind: input, shape index: {}]
  %s3 = inlined_call_operand.vmem [shape: f32[1,128], index: 3, kind: input, shape index: {}]
  %s4 = inlined_call_operand.vmem [shape: f32[8,128], index: 4, kind: output, shape index: {}]
  %s5 = sld [smem:[#allocation0]]
  $region34: #{net_forward.4} parent=0
    _
  %s7 = ssub.s32 1, %s5
  %s8 = scalar_select 0, %s7, %s5
  // Predicated region
  $region2: #{net_forward.4} parent=0 // pred_check
    _
  $region3: #{net_forward.4} parent=0 // pred_check_branch
    %10 = sbr.rel (0) target = $region5
  $region4: #{net_forward.4} parent=0 // pred_region
    _
  $region5: #{net_forward.4} parent=0 // pred_fallthru
    _
  // Predicated region
  $region6: #{net_forward.4} parent=0 // pred_check
    _
  $region7: #{net_forward.4} parent=0 // pred_check_branch
    %12 = sbr.rel (0) target = $region9
  $region8: #{net_forward.4} parent=0 // pred_region
    _
  $region9: #{net_forward.4} parent=0 // pred_fallthru
    _
  // Predicated region
  $region10: #{net_forward.4} parent=0 // pred_check
    _
  $region11: #{net_forward.4} parent=0 // pred_check_branch
    %14 = sbr.rel (0) target = $region13
  $region12: #{net_forward.4} parent=0 // pred_region
    _
  $region13: #{net_forward.4} parent=0 // pred_fallthru
    _
  // Predicated region
  $region14: #{net_forward.4} parent=0 // pred_check
    _
  $region15: #{net_forward.4} parent=0 // pred_check_branch
    %16 = sbr.rel (0) target = $region17
  $region16: #{net_forward.4} parent=0 // pred_region
    _
  $region17: #{net_forward.4} parent=0 // pred_fallthru
    _
  %p17 = scmp.eq.s32.totalorder 0, 0
  // Predicated region
  $region18: #{net_forward.4} parent=0 // pred_check
    %p18 = pneg %p17
  $region19: #{net_forward.4} parent=0 // pred_check_branch
    %20 = sbr.rel (%p18) target = $region21
  $region20: #{net_forward.4} parent=0 // pred_region
    %21 = vst [vmem:[#allocation2] sm:$0xff] 0.0
  $region21: #{net_forward.4} parent=0 // pred_fallthru
    _
  %v22 = vld [vmem:[%s0] sm:$0xf]
  %v23 = vld [vmem:[%s0 + $0x4] sm:$0xf]
  %v24 = vld [vmem:[%s0 + $0x8] sm:$0xf]
  %v25 = vld [vmem:[%s0 + $0xc] sm:$0xf]
  %v26 = vld [vmem:[%s0 + $0x10] sm:$0xf]
  %v27 = vld [vmem:[%s0 + $0x14] sm:$0xf]
  %v28 = vld [vmem:[%s0 + $0x18] sm:$0xf]
  %v29 = vld [vmem:[%s0 + $0x1c] sm:$0xf]
  %v30 = vld [vmem:[%s1] sm:$0xf]
  %v31 = vmul.f32 %v22, %v30
  %v32 = vmul.f32 %v23, %v30
  %v33 = vmul.f32 %v24, %v30
  %v34 = vmul.f32 %v25, %v30
  %v35 = vmul.f32 %v26, %v30
  %v36 = vmul.f32 %v27, %v30
  %v37 = vmul.f32 %v28, %v30
  %v38 = vmul.f32 %v29, %v30
  %vm39 = vcmask 1043456
  %v40 = vsel %vm39, %v31, 0.0
  %v41 = vrot.slane %v40, 4
  %v42 = vadd.f32 %v40, %v41
  %v43 = vrot.slane %v42, 2
  %v44 = vadd.f32 %v42, %v43
  %v45 = vrot.slane %v44, 1
  %v46 = vadd.f32 %v44, %v45
  %v47 = vsel %vm39, %v32, 0.0
  %v48 = vrot.slane %v47, 4
  %v49 = vadd.f32 %v47, %v48
  %v50 = vrot.slane %v49, 2
  %v51 = vadd.f32 %v49, %v50
  %v52 = vrot.slane %v51, 1
  %v53 = vadd.f32 %v51, %v52
  %v54 = vsel %vm39, %v33, 0.0
  %v55 = vrot.slane %v54, 4
  %v56 = vadd.f32 %v54, %v55
  %v57 = vrot.slane %v56, 2
  %v58 = vadd.f32 %v56, %v57
  %v59 = vrot.slane %v58, 1
  %v60 = vadd.f32 %v58, %v59
  %v61 = vsel %vm39, %v34, 0.0
  %v62 = vrot.slane %v61, 4
  %v63 = vadd.f32 %v61, %v62
  %v64 = vrot.slane %v63, 2
  %v65 = vadd.f32 %v63, %v64
  %v66 = vrot.slane %v65, 1
  %v67 = vadd.f32 %v65, %v66
  %v68 = vsel %vm39, %v35, 0.0
  %v69 = vrot.slane %v68, 4
  %v70 = vadd.f32 %v68, %v69
  %v71 = vrot.slane %v70, 2
  %v72 = vadd.f32 %v70, %v71
  %v73 = vrot.slane %v72, 1
  %v74 = vadd.f32 %v72, %v73
  %v75 = vsel %vm39, %v36, 0.0
  %v76 = vrot.slane %v75, 4
  %v77 = vadd.f32 %v75, %v76
  %v78 = vrot.slane %v77, 2
  %v79 = vadd.f32 %v77, %v78
  %v80 = vrot.slane %v79, 1
  %v81 = vadd.f32 %v79, %v80
  %v82 = vsel %vm39, %v37, 0.0
  %v83 = vrot.slane %v82, 4
  %v84 = vadd.f32 %v82, %v83
  %v85 = vrot.slane %v84, 2
  %v86 = vadd.f32 %v84, %v85
  %v87 = vrot.slane %v86, 1
  %v88 = vadd.f32 %v86, %v87
  %v89 = vsel %vm39, %v38, 0.0
  %v90 = vrot.slane %v89, 4
  %v91 = vadd.f32 %v89, %v90
  %v92 = vrot.slane %v91, 2
  %v93 = vadd.f32 %v91, %v92
  %v94 = vrot.slane %v93, 1
  %v95 = vadd.f32 %v93, %v94
  %v96 = vld [vmem:[#allocation2] sm:$0xff]
  %v97 = vpack.c.bf16 %v46, %v46
  %v98 = vpack.c.bf16 %v53, %v53
  %v99 = vpack.c.bf16 %v60, %v60
  %v100 = vpack.c.bf16 %v67, %v67
  %v101 = vpack.c.bf16 %v74, %v74
  %v102 = vpack.c.bf16 %v81, %v81
  %v103 = vpack.c.bf16 %v88, %v88
  %v104 = vpack.c.bf16 %v95, %v95
  %v105 = vld [vmem:[%s2] sm:$0xf]
  %v106 = vld [vmem:[%s2 + $0x4] sm:$0xf]
  %v107 = vld [vmem:[%s2 + $0x8] sm:$0xf]
  %v108 = vld [vmem:[%s2 + $0xc] sm:$0xf]
  %v109 = vld [vmem:[%s2 + $0x10] sm:$0xf]
  %v110 = vld [vmem:[%s2 + $0x14] sm:$0xf]
  %v111 = vld [vmem:[%s2 + $0x18] sm:$0xf]
  %v112 = vld [vmem:[%s2 + $0x1c] sm:$0xf]
  %v113 = vld [vmem:[%s2 + $0x20] sm:$0xf]
  %v114 = vld [vmem:[%s2 + $0x24] sm:$0xf]
  %v115 = vld [vmem:[%s2 + $0x28] sm:$0xf]
  %v116 = vld [vmem:[%s2 + $0x2c] sm:$0xf]
  %v117 = vld [vmem:[%s2 + $0x30] sm:$0xf]
  %v118 = vld [vmem:[%s2 + $0x34] sm:$0xf]
  %v119 = vld [vmem:[%s2 + $0x38] sm:$0xf]
  %v120 = vld [vmem:[%s2 + $0x3c] sm:$0xf]
  %v129 = vunpack.c.l.b16 %v97
  %v130 = vunpack.c.l.b16 %v98
  %v131 = vunpack.c.l.b16 %v99
  %v132 = vunpack.c.l.b16 %v100
  %v133 = vunpack.c.l.b16 %v101
  %v134 = vunpack.c.l.b16 %v102
  %v135 = vunpack.c.l.b16 %v103
  %v136 = vunpack.c.l.b16 %v104
  %vm137 = vcmask 1041409
  %v138 = vsel %vm137, %v130, %v129
  %vm139 = vcmask 1042434
  %v140 = vsel %vm139, %v131, %v138
  %vm141 = vcmask 1043459
  %v142 = vsel %vm141, %v132, %v140
  %vm143 = vcmask 1044484
  %v144 = vsel %vm143, %v133, %v142
  %vm145 = vcmask 1045509
  %v146 = vsel %vm145, %v134, %v144
  %vm147 = vcmask 1046534
  %v148 = vsel %vm147, %v135, %v146
  %vm149 = vcmask 1047559
  %v150 = vsel %vm149, %v136, %v148
  %v151 = vpack.c.b16 %v150, %v150
  %v169 = vunpack.c.l.b16 %v105
  %v170 = vunpack.c.l.b16 %v106
  %v171 = vunpack.c.l.b16 %v107
  %v172 = vunpack.c.l.b16 %v108
  %v173 = vunpack.c.l.b16 %v109
  %v174 = vunpack.c.l.b16 %v110
  %v175 = vunpack.c.l.b16 %v111
  %v176 = vunpack.c.l.b16 %v112
  %v177 = vunpack.c.l.b16 %v113
  %v178 = vunpack.c.l.b16 %v114
  %v179 = vunpack.c.l.b16 %v115
  %v180 = vunpack.c.l.b16 %v116
  %v181 = vunpack.c.l.b16 %v117
  %v182 = vunpack.c.l.b16 %v118
  %v183 = vunpack.c.l.b16 %v119
  %v184 = vunpack.c.l.b16 %v120
  %v185 = vpack.c.b16 %v170, %v169
  %v186 = vpack.c.b16 %v172, %v171
  %v187 = vpack.c.b16 %v174, %v173
  %v188 = vpack.c.b16 %v176, %v175
  %v189 = vpack.c.b16 %v178, %v177
  %v190 = vpack.c.b16 %v180, %v179
  %v191 = vpack.c.b16 %v182, %v181
  %v192 = vpack.c.b16 %v184, %v183
  %201 = vmatpush.bf16.msra.mxu0 %v192
  %202 = vmatpush.bf16.msra.mxu0 %v191
  %203 = vmatpush.bf16.msra.mxu0 %v190
  %204 = vmatpush.bf16.msra.mxu0 %v189
  %205 = vmatpush.bf16.msra.mxu0 %v188
  %206 = vmatpush.bf16.msra.mxu0 %v187
  %207 = vmatpush.bf16.msra.mxu0 %v186
  %208 = vmatpush.bf16.msra.mxu0 %v185
  %209 = vmatmul.bf16.gmra.mxu0 %v151
  %v210 = vpop.f32.mrf.mxu0
  %v211 = vadd.f32 0.0, %v210
  %v212 = vpop.f32.mrf.mxu0
  %213 = vdwg.mxu0
  %v214 = vadd.f32 %v96, %v211
  %215 = vst [vmem:[#allocation2] sm:$0xff] %v214
  // Predicated region
  $region22: #{net_forward.4} parent=0 // pred_check
    %p216 = pneg %p17
  $region23: #{net_forward.4} parent=0 // pred_check_branch
    %218 = sbr.rel (%p216) target = $region25
  $region24: #{net_forward.4} parent=0 // pred_region
    %v219 = vld [vmem:[#allocation2] sm:$0xff]
    %v220 = vld [vmem:[%s3] sm:$0x1]
    %v222 = vperm.slane %v220, 0
    %v224 = vadd.f32 %v219, %v222
    %vm225 = vcmp.gt.f32.partialorder %v224, 0.0
    %v226 = vmul.f32 %v224, 0.01
    %v227 = vsel %vm225, %v224, %v226
    %228 = vst [vmem:[%s4] sm:$0xff] %v227
  $region25: #{net_forward.4} parent=0 // pred_fallthru
    _
  // Predicated region
  $region26: #{net_forward.4} parent=0 // pred_check
    _
  $region27: #{net_forward.4} parent=0 // pred_check_branch
    %230 = sbr.rel (0) target = $region29
  $region28: #{net_forward.4} parent=0 // pred_region
    _
  $region29: #{net_forward.4} parent=0 // pred_fallthru
    _
  // Predicated region
  $region30: #{net_forward.4} parent=0 // pred_check
    _
  $region31: #{net_forward.4} parent=0 // pred_check_branch
    %232 = sbr.rel (0) target = $region33
  $region32: #{net_forward.4} parent=0 // pred_region
    _
  $region33: #{net_forward.4} parent=0 // pred_fallthru
    _

// kernel: net_forward.5
$region0: #{net_forward.5}
  #allocation0 [shape = 'u32[]', space=smem, size = 0x4, offset = 0x4, fixed_abs, tag = 'smem constant byte address 0x4 - core index']
  #allocation1 [shape = 'u32[72,128]{1,0:T(1,128)}', space=vmem, size = 0x9000, scoped, tag = 'internal scratch']
  #allocation2 [shape = 'f32[8,128]{1,0:T(8,128)}', space=vmem, size = 0x1000, scoped, tag = 'scratch operand']
  %s0 = inlined_call_operand.vmem [shape: bf16[8,128], index: 0, kind: input, shape index: {}]
  %s1 = inlined_call_operand.vmem [shape: bf16[128,128], index: 1, kind: input, shape index: {}]
  %s2 = inlined_call_operand.vmem [shape: f32[1,128], index: 2, kind: input, shape index: {}]
  %s3 = inlined_call_operand.vmem [shape: f32[8,128], index: 3, kind: output, shape index: {}]
  %s4 = sld [smem:[#allocation0]]
  $region30: #{net_forward.5} parent=0
    _
  %s6 = ssub.s32 1, %s4
  %s7 = scalar_select 0, %s6, %s4
  // Predicated region
  $region2: #{net_forward.5} parent=0 // pred_check
    _
  $region3: #{net_forward.5} parent=0 // pred_check_branch
    %9 = sbr.rel (0) target = $region5
  $region4: #{net_forward.5} parent=0 // pred_region
    _
  $region5: #{net_forward.5} parent=0 // pred_fallthru
    _
  // Predicated region
  $region6: #{net_forward.5} parent=0 // pred_check
    _
  $region7: #{net_forward.5} parent=0 // pred_check_branch
    %11 = sbr.rel (0) target = $region9
  $region8: #{net_forward.5} parent=0 // pred_region
    _
  $region9: #{net_forward.5} parent=0 // pred_fallthru
    _
  // Predicated region
  $region10: #{net_forward.5} parent=0 // pred_check
    _
  $region11: #{net_forward.5} parent=0 // pred_check_branch
    %13 = sbr.rel (0) target = $region13
  $region12: #{net_forward.5} parent=0 // pred_region
    _
  $region13: #{net_forward.5} parent=0 // pred_fallthru
    _
  %p14 = scmp.eq.s32.totalorder 0, 0
  // Predicated region
  $region14: #{net_forward.5} parent=0 // pred_check
    %p15 = pneg %p14
  $region15: #{net_forward.5} parent=0 // pred_check_branch
    %17 = sbr.rel (%p15) target = $region17
  $region16: #{net_forward.5} parent=0 // pred_region
    %18 = vst [vmem:[#allocation2] sm:$0xff] 0.0
  $region17: #{net_forward.5} parent=0 // pred_fallthru
    _
  %v19 = vld [vmem:[#allocation2] sm:$0xff]
  %v20 = vld [vmem:[%s0] sm:$0xf]
  %v21 = vld [vmem:[%s1] sm:$0xf]
  %v22 = vld [vmem:[%s1 + $0x4] sm:$0xf]
  %v23 = vld [vmem:[%s1 + $0x8] sm:$0xf]
  %v24 = vld [vmem:[%s1 + $0xc] sm:$0xf]
  %v25 = vld [vmem:[%s1 + $0x10] sm:$0xf]
  %v26 = vld [vmem:[%s1 + $0x14] sm:$0xf]
  %v27 = vld [vmem:[%s1 + $0x18] sm:$0xf]
  %v28 = vld [vmem:[%s1 + $0x1c] sm:$0xf]
  %v29 = vld [vmem:[%s1 + $0x20] sm:$0xf]
  %v30 = vld [vmem:[%s1 + $0x24] sm:$0xf]
  %v31 = vld [vmem:[%s1 + $0x28] sm:$0xf]
  %v32 = vld [vmem:[%s1 + $0x2c] sm:$0xf]
  %v33 = vld [vmem:[%s1 + $0x30] sm:$0xf]
  %v34 = vld [vmem:[%s1 + $0x34] sm:$0xf]
  %v35 = vld [vmem:[%s1 + $0x38] sm:$0xf]
  %v36 = vld [vmem:[%s1 + $0x3c] sm:$0xf]
  %v53 = vunpack.c.l.b16 %v21
  %v54 = vunpack.c.l.b16 %v22
  %v55 = vunpack.c.l.b16 %v23
  %v56 = vunpack.c.l.b16 %v24
  %v57 = vunpack.c.l.b16 %v25
  %v58 = vunpack.c.l.b16 %v26
  %v59 = vunpack.c.l.b16 %v27
  %v60 = vunpack.c.l.b16 %v28
  %v61 = vunpack.c.l.b16 %v29
  %v62 = vunpack.c.l.b16 %v30
  %v63 = vunpack.c.l.b16 %v31
  %v64 = vunpack.c.l.b16 %v32
  %v65 = vunpack.c.l.b16 %v33
  %v66 = vunpack.c.l.b16 %v34
  %v67 = vunpack.c.l.b16 %v35
  %v68 = vunpack.c.l.b16 %v36
  %v69 = vpack.c.b16 %v54, %v53
  %v70 = vpack.c.b16 %v56, %v55
  %v71 = vpack.c.b16 %v58, %v57
  %v72 = vpack.c.b16 %v60, %v59
  %v73 = vpack.c.b16 %v62, %v61
  %v74 = vpack.c.b16 %v64, %v63
  %v75 = vpack.c.b16 %v66, %v65
  %v76 = vpack.c.b16 %v68, %v67
  %85 = vmatpush.bf16.msra.mxu0 %v76
  %86 = vmatpush.bf16.msra.mxu0 %v75
  %87 = vmatpush.bf16.msra.mxu0 %v74
  %88 = vmatpush.bf16.msra.mxu0 %v73
  %89 = vmatpush.bf16.msra.mxu0 %v72
  %90 = vmatpush.bf16.msra.mxu0 %v71
  %91 = vmatpush.bf16.msra.mxu0 %v70
  %92 = vmatpush.bf16.msra.mxu0 %v69
  %93 = vmatmul.bf16.gmra.mxu0 %v20
  %v94 = vpop.f32.mrf.mxu0
  %v95 = vadd.f32 0.0, %v94
  %v96 = vpop.f32.mrf.mxu0
  %97 = vdwg.mxu0
  %v98 = vadd.f32 %v19, %v95
  %99 = vst [vmem:[#allocation2] sm:$0xff] %v98
  // Predicated region
  $region18: #{net_forward.5} parent=0 // pred_check
    %p100 = pneg %p14
  $region19: #{net_forward.5} parent=0 // pred_check_branch
    %102 = sbr.rel (%p100) target = $region21
  $region20: #{net_forward.5} parent=0 // pred_region
    %v103 = vld [vmem:[#allocation2] sm:$0xff]
    %v104 = vld [vmem:[%s2] sm:$0x1]
    %v106 = vperm.slane %v104, 0
    %v108 = vadd.f32 %v103, %v106
    %vm109 = vcmp.gt.f32.partialorder %v108, 0.0
    %v110 = vmul.f32 %v108, 0.01
    %v111 = vsel %vm109, %v108, %v110
    %112 = vst [vmem:[%s3] sm:$0xff] %v111
  $region21: #{net_forward.5} parent=0 // pred_fallthru
    _
  // Predicated region
  $region22: #{net_forward.5} parent=0 // pred_check
    _
  $region23: #{net_forward.5} parent=0 // pred_check_branch
    %114 = sbr.rel (0) target = $region25
  $region24: #{net_forward.5} parent=0 // pred_region
    _
  $region25: #{net_forward.5} parent=0 // pred_fallthru
    _
  // Predicated region
  $region26: #{net_forward.5} parent=0 // pred_check
    _
  $region27: #{net_forward.5} parent=0 // pred_check_branch
    %116 = sbr.rel (0) target = $region29
  $region28: #{net_forward.5} parent=0 // pred_region
    _
  $region29: #{net_forward.5} parent=0 // pred_fallthru
    _

// kernel: net_forward.7
$region0: #{net_forward.7}
  #allocation0 [shape = 'u32[]', space=smem, size = 0x4, offset = 0x4, fixed_abs, tag = 'smem constant byte address 0x4 - core index']
  #allocation1 [shape = 'u32[72,128]{1,0:T(1,128)}', space=vmem, size = 0x9000, scoped, tag = 'internal scratch']
  #allocation2 [shape = 'f32[8,128]{1,0:T(8,128)}', space=vmem, size = 0x1000, scoped, tag = 'scratch operand']
  %s0 = inlined_call_operand.vmem [shape: bf16[8,128], index: 0, kind: input, shape index: {}]
  %s1 = inlined_call_operand.vmem [shape: bf16[128,128], index: 1, kind: input, shape index: {}]
  %s2 = inlined_call_operand.vmem [shape: f32[1,128], index: 2, kind: input, shape index: {}]
  %s3 = inlined_call_operand.vmem [shape: f32[8,128], index: 3, kind: output, shape index: {}]
  %s4 = sld [smem:[#allocation0]]
  $region30: #{net_forward.7} parent=0
    _
  %s6 = ssub.s32 1, %s4
  %s7 = scalar_select 0, %s6, %s4
  // Predicated region
  $region2: #{net_forward.7} parent=0 // pred_check
    _
  $region3: #{net_forward.7} parent=0 // pred_check_branch
    %9 = sbr.rel (0) target = $region5
  $region4: #{net_forward.7} parent=0 // pred_region
    _
  $region5: #{net_forward.7} parent=0 // pred_fallthru
    _
  // Predicated region
  $region6: #{net_forward.7} parent=0 // pred_check
    _
  $region7: #{net_forward.7} parent=0 // pred_check_branch
    %11 = sbr.rel (0) target = $region9
  $region8: #{net_forward.7} parent=0 // pred_region
    _
  $region9: #{net_forward.7} parent=0 // pred_fallthru
    _
  // Predicated region
  $region10: #{net_forward.7} parent=0 // pred_check
    _
  $region11: #{net_forward.7} parent=0 // pred_check_branch
    %13 = sbr.rel (0) target = $region13
  $region12: #{net_forward.7} parent=0 // pred_region
    _
  $region13: #{net_forward.7} parent=0 // pred_fallthru
    _
  %p14 = scmp.eq.s32.totalorder 0, 0
  // Predicated region
  $region14: #{net_forward.7} parent=0 // pred_check
    %p15 = pneg %p14
  $region15: #{net_forward.7} parent=0 // pred_check_branch
    %17 = sbr.rel (%p15) target = $region17
  $region16: #{net_forward.7} parent=0 // pred_region
    %18 = vst [vmem:[#allocation2] sm:$0xff] 0.0
  $region17: #{net_forward.7} parent=0 // pred_fallthru
    _
  %v19 = vld [vmem:[#allocation2] sm:$0xff]
  %v20 = vld [vmem:[%s0] sm:$0xf]
  %v21 = vld [vmem:[%s1] sm:$0xf]
  %v22 = vld [vmem:[%s1 + $0x4] sm:$0xf]
  %v23 = vld [vmem:[%s1 + $0x8] sm:$0xf]
  %v24 = vld [vmem:[%s1 + $0xc] sm:$0xf]
  %v25 = vld [vmem:[%s1 + $0x10] sm:$0xf]
  %v26 = vld [vmem:[%s1 + $0x14] sm:$0xf]
  %v27 = vld [vmem:[%s1 + $0x18] sm:$0xf]
  %v28 = vld [vmem:[%s1 + $0x1c] sm:$0xf]
  %v29 = vld [vmem:[%s1 + $0x20] sm:$0xf]
  %v30 = vld [vmem:[%s1 + $0x24] sm:$0xf]
  %v31 = vld [vmem:[%s1 + $0x28] sm:$0xf]
  %v32 = vld [vmem:[%s1 + $0x2c] sm:$0xf]
  %v33 = vld [vmem:[%s1 + $0x30] sm:$0xf]
  %v34 = vld [vmem:[%s1 + $0x34] sm:$0xf]
  %v35 = vld [vmem:[%s1 + $0x38] sm:$0xf]
  %v36 = vld [vmem:[%s1 + $0x3c] sm:$0xf]
  %v53 = vunpack.c.l.b16 %v21
  %v54 = vunpack.c.l.b16 %v22
  %v55 = vunpack.c.l.b16 %v23
  %v56 = vunpack.c.l.b16 %v24
  %v57 = vunpack.c.l.b16 %v25
  %v58 = vunpack.c.l.b16 %v26
  %v59 = vunpack.c.l.b16 %v27
  %v60 = vunpack.c.l.b16 %v28
  %v61 = vunpack.c.l.b16 %v29
  %v62 = vunpack.c.l.b16 %v30
  %v63 = vunpack.c.l.b16 %v31
  %v64 = vunpack.c.l.b16 %v32
  %v65 = vunpack.c.l.b16 %v33
  %v66 = vunpack.c.l.b16 %v34
  %v67 = vunpack.c.l.b16 %v35
  %v68 = vunpack.c.l.b16 %v36
  %v69 = vpack.c.b16 %v54, %v53
  %v70 = vpack.c.b16 %v56, %v55
  %v71 = vpack.c.b16 %v58, %v57
  %v72 = vpack.c.b16 %v60, %v59
  %v73 = vpack.c.b16 %v62, %v61
  %v74 = vpack.c.b16 %v64, %v63
  %v75 = vpack.c.b16 %v66, %v65
  %v76 = vpack.c.b16 %v68, %v67
  %85 = vmatpush.bf16.msra.mxu0 %v76
  %86 = vmatpush.bf16.msra.mxu0 %v75
  %87 = vmatpush.bf16.msra.mxu0 %v74
  %88 = vmatpush.bf16.msra.mxu0 %v73
  %89 = vmatpush.bf16.msra.mxu0 %v72
  %90 = vmatpush.bf16.msra.mxu0 %v71
  %91 = vmatpush.bf16.msra.mxu0 %v70
  %92 = vmatpush.bf16.msra.mxu0 %v69
  %93 = vmatmul.bf16.gmra.mxu0 %v20
  %v94 = vpop.f32.mrf.mxu0
  %v95 = vadd.f32 0.0, %v94
  %v96 = vpop.f32.mrf.mxu0
  %97 = vdwg.mxu0
  %v98 = vadd.f32 %v19, %v95
  %99 = vst [vmem:[#allocation2] sm:$0xff] %v98
  // Predicated region
  $region18: #{net_forward.7} parent=0 // pred_check
    %p100 = pneg %p14
  $region19: #{net_forward.7} parent=0 // pred_check_branch
    %102 = sbr.rel (%p100) target = $region21
  $region20: #{net_forward.7} parent=0 // pred_region
    %v103 = vld [vmem:[#allocation2] sm:$0xff]
    %v104 = vld [vmem:[%s2] sm:$0x1]
    %v106 = vperm.slane %v104, 0
    %v108 = vadd.f32 %v103, %v106
    %109 = vst [vmem:[%s3] sm:$0xff] %v108
  $region21: #{net_forward.7} parent=0 // pred_fallthru
    _
  // Predicated region
  $region22: #{net_forward.7} parent=0 // pred_check
    _
  $region23: #{net_forward.7} parent=0 // pred_check_branch
    %111 = sbr.rel (0) target = $region25
  $region24: #{net_forward.7} parent=0 // pred_region
    _
  $region25: #{net_forward.7} parent=0 // pred_fallthru
    _
  // Predicated region
  $region26: #{net_forward.7} parent=0 // pred_check
    _
  $region27: #{net_forward.7} parent=0 // pred_check_branch
    %113 = sbr.rel (0) target = $region29
  $region28: #{net_forward.7} parent=0 // pred_region
    _
  $region29: #{net_forward.7} parent=0 // pred_fallthru
    _

// kernel: net_forward.6
$region0: #{net_forward.6}
  #allocation0 [shape = 'u32[]', space=smem, size = 0x4, offset = 0x4, fixed_abs, tag = 'smem constant byte address 0x4 - core index']
  #allocation1 [shape = 'u32[72,128]{1,0:T(1,128)}', space=vmem, size = 0x9000, scoped, tag = 'internal scratch']
  %s0 = inlined_call_operand.vmem [shape: f32[2,6,8], index: 0, kind: input, shape index: {}]
  %s1 = inlined_call_operand.vmem [shape: f32[6,8], index: 1, kind: input, shape index: {}]
  %s2 = inlined_call_operand.vmem [shape: f32[2,8], index: 2, kind: input, shape index: {}]
  %s3 = inlined_call_operand.vmem [shape: f32[4,1], index: 3, kind: input, shape index: {}]
  %s4 = inlined_call_operand.vmem [shape: f32[8,8], index: 4, kind: input, shape index: {}]
  %s5 = inlined_call_operand.vmem [shape: f32[1,8], index: 5, kind: input, shape index: {}]
  %s6 = inlined_call_operand.vmem [shape: f32[2,4,8], index: 6, kind: output, shape index: {}]
  %s7 = sld [smem:[#allocation0]]
  $region34: #{net_forward.6} parent=0
    _
  %s9 = ssub.s32 1, %s7
  %s10 = scalar_select 0, %s9, %s7
  // Predicated region
  $region2: #{net_forward.6} parent=0 // pred_check
    _
  $region3: #{net_forward.6} parent=0 // pred_check_branch
    %12 = sbr.rel (0) target = $region5
  $region4: #{net_forward.6} parent=0 // pred_region
    _
  $region5: #{net_forward.6} parent=0 // pred_fallthru
    _
  // Predicated region
  $region6: #{net_forward.6} parent=0 // pred_check
    _
  $region7: #{net_forward.6} parent=0 // pred_check_branch
    %14 = sbr.rel (0) target = $region9
  $region8: #{net_forward.6} parent=0 // pred_region
    _
  $region9: #{net_forward.6} parent=0 // pred_fallthru
    _
  // Predicated region
  $region10: #{net_forward.6} parent=0 // pred_check
    _
  $region11: #{net_forward.6} parent=0 // pred_check_branch
    %16 = sbr.rel (0) target = $region13
  $region12: #{net_forward.6} parent=0 // pred_region
    _
  $region13: #{net_forward.6} parent=0 // pred_fallthru
    _
  // Predicated region
  $region14: #{net_forward.6} parent=0 // pred_check
    _
  $region15: #{net_forward.6} parent=0 // pred_check_branch
    %18 = sbr.rel (0) target = $region17
  $region16: #{net_forward.6} parent=0 // pred_region
    _
  $region17: #{net_forward.6} parent=0 // pred_fallthru
    _
  // Predicated region
  $region18: #{net_forward.6} parent=0 // pred_check
    _
  $region19: #{net_forward.6} parent=0 // pred_check_branch
    %20 = sbr.rel (0) target = $region21
  $region20: #{net_forward.6} parent=0 // pred_region
    _
  $region21: #{net_forward.6} parent=0 // pred_fallthru
    _
  // Predicated region
  $region22: #{net_forward.6} parent=0 // pred_check
    _
  $region23: #{net_forward.6} parent=0 // pred_check_branch
    %22 = sbr.rel (0) target = $region25
  $region24: #{net_forward.6} parent=0 // pred_region
    _
  $region25: #{net_forward.6} parent=0 // pred_fallthru
    _
  %v23 = vld [vmem:[%s0] sm:$0x3f]
  %v24 = vld [vmem:[%s0 + $0x8] sm:$0x3f]
  %v25 = vld [vmem:[%s1] sm:$0x3f]
  %v26 = vld [vmem:[%s2] sm:$0x3]
  %v27 = vld [vmem:[%s4] sm:$0xff]
  %v28 = vld [vmem:[%s5] sm:$0x1]
  %v29 = vperm.slane %v25, 0
  %v30 = vlaneseq
  %v31 = vshrl.u32 %v30, 7
  %33 = vset.pattern.permute.xlu0 %v31
  %34 = vperm.xlu0 %33, %v29
  %v35 = vpop.permute.xlu0 %34
  %v36 = vperm.slane %v23, 0
  %v37 = vperm.slane %v24, 0
  %v38 = vmul.f32 %v36, %v35
  %v39 = vmul.f32 %v37, %v35
  %v40 = vadd.f32 %v38, 0.0
  %v41 = vadd.f32 %v39, 0.0
  %v42 = vperm.slane %v25, 1
  %v43 = vlaneseq
  %v44 = vshrl.u32 %v43, 7
  %46 = vset.pattern.permute.xlu0 %v44
  %47 = vperm.xlu0 %46, %v42
  %v48 = vpop.permute.xlu0 %47
  %v49 = vperm.slane %v23, 1
  %v50 = vperm.slane %v24, 1
  %v51 = vmul.f32 %v49, %v48
  %v52 = vmul.f32 %v50, %v48
  %v53 = vadd.f32 %v40, %v51
  %v54 = vadd.f32 %v41, %v52
  %v55 = vperm.slane %v25, 2
  %v56 = vlaneseq
  %v57 = vshrl.u32 %v56, 7
  %59 = vset.pattern.permute.xlu0 %v57
  %60 = vperm.xlu0 %59, %v55
  %v61 = vpop.permute.xlu0 %60
  %v62 = vperm.slane %v23, 2
  %v63 = vperm.slane %v24, 2
  %v64 = vmul.f32 %v62, %v61
  %v65 = vmul.f32 %v63, %v61
  %v66 = vadd.f32 %v53, %v64
  %v67 = vadd.f32 %v54, %v65
  %v68 = vperm.slane %v25, 3
  %v69 = vlaneseq
  %v70 = vshrl.u32 %v69, 7
  %72 = vset.pattern.permute.xlu0 %v70
  %73 = vperm.xlu0 %72, %v68
  %v74 = vpop.permute.xlu0 %73
  %v75 = vperm.slane %v23, 3
  %v76 = vperm.slane %v24, 3
  %v77 = vmul.f32 %v75, %v74
  %v78 = vmul.f32 %v76, %v74
  %v79 = vadd.f32 %v66, %v77
  %v80 = vadd.f32 %v67, %v78
  %v81 = vperm.slane %v25, 4
  %v82 = vlaneseq
  %v83 = vshrl.u32 %v82, 7
  %85 = vset.pattern.permute.xlu0 %v83
  %86 = vperm.xlu0 %85, %v81
  %v87 = vpop.permute.xlu0 %86
  %v88 = vperm.slane %v23, 4
  %v89 = vperm.slane %v24, 4
  %v90 = vmul.f32 %v88, %v87
  %v91 = vmul.f32 %v89, %v87
  %v92 = vadd.f32 %v79, %v90
  %v93 = vadd.f32 %v80, %v91
  %v94 = vperm.slane %v25, 5
  %v95 = vlaneseq
  %v96 = vshrl.u32 %v95, 7
  %98 = vset.pattern.permute.xlu0 %v96
  %99 = vperm.xlu0 %98, %v94
  %v100 = vpop.permute.xlu0 %99
  %v101 = vperm.slane %v23, 5
  %v102 = vperm.slane %v24, 5
  %v103 = vmul.f32 %v101, %v100
  %v104 = vmul.f32 %v102, %v100
  %v105 = vadd.f32 %v92, %v103
  %v106 = vadd.f32 %v93, %v104
  %v107 = vperm.slane %v26, 0
  %v108 = vlaneseq
  %v109 = vshrl.u32 %v108, 7
  %111 = vset.pattern.permute.xlu0 %v109
  %112 = vperm.xlu0 %111, %v107
  %v113 = vpop.permute.xlu0 %112
  %v114 = vmul.f32 %v105, %v113
  %v115 = vmul.f32 %v106, %v113
  %vm116 = vcmask 60416
  %v117 = vsel %vm116, %v114, 0.0
  %v118 = vrot.slane %v117, 4
  %v119 = vadd.f32 %v117, %v118
  %v120 = vrot.slane %v119, 2
  %v121 = vadd.f32 %v119, %v120
  %v122 = vrot.slane %v121, 1
  %v123 = vadd.f32 %v121, %v122
  %v124 = vsel %vm116, %v115, 0.0
  %v125 = vrot.slane %v124, 4
  %v126 = vadd.f32 %v124, %v125
  %v127 = vrot.slane %v126, 2
  %v128 = vadd.f32 %v126, %v127
  %v129 = vrot.slane %v128, 1
  %v130 = vadd.f32 %v128, %v129
  %v131 = vlaneseq
  %v132 = vshrl.u32 %v131, 7
  %v133 = vadd.s32 %v132, 4
  %134 = vset.pattern.permute.xlu0 %v133
  %135 = vperm.xlu0 %134, %v107
  %v136 = vpop.permute.xlu0 %135
  %v137 = vmul.f32 %v105, %v136
  %v138 = vmul.f32 %v106, %v136
  %v139 = vsel %vm116, %v137, 0.0
  %v140 = vrot.slane %v139, 4
  %v141 = vadd.f32 %v139, %v140
  %v142 = vrot.slane %v141, 2
  %v143 = vadd.f32 %v141, %v142
  %v144 = vrot.slane %v143, 1
  %v145 = vadd.f32 %v143, %v144
  %v146 = vsel %vm116, %v138, 0.0
  %v147 = vrot.slane %v146, 4
  %v148 = vadd.f32 %v146, %v147
  %v149 = vrot.slane %v148, 2
  %v150 = vadd.f32 %v148, %v149
  %v151 = vrot.slane %v150, 1
  %v152 = vadd.f32 %v150, %v151
  %v153 = vlaneseq
  %v154 = vshrl.u32 %v153, 7
  %156 = vset.pattern.permute.xlu0 %v154
  %157 = vperm.xlu0 %156, %v145
  %v158 = vpop.permute.xlu0 %157
  %v159 = vlaneseq
  %v160 = vshrl.u32 %v159, 7
  %162 = vset.pattern.permute.xlu0 %v160
  %163 = vperm.xlu0 %162, %v152
  %v164 = vpop.permute.xlu0 %163
  %v165 = vadd.f32 %v158, %v123
  %v166 = vadd.f32 %v164, %v130
  %vm167 = vcmp.gt.f32.partialorder %v165, 0.0
  %vm168 = vcmp.gt.f32.partialorder %v166, 0.0
  %v169 = vmul.f32 %v165, 0.2
  %v170 = vmul.f32 %v166, 0.2
  %v171 = vsel %vm167, %v165, %v169
  %v172 = vsel %vm168, %v166, %v170
  %vm173 = vcmp.gt.f32.partialorder %v27, 0.0
  %v174 = vsel %vm173, 1, 0
  %vm175 = vcmp.eq.s32.totalorder %v174, 1
  %v176 = vsel %vm175, %v171, -1e+30
  %v177 = vsel %vm175, %v172, -1e+30
  %vm178 = vcmask 64512
  %v179 = vsel %vm178, %v176, -inf
  %v180 = vrot.slane %v179, 4
  %v181 = vmax.f32 %v179, %v180
  %v182 = vrot.slane %v181, 2
  %v183 = vmax.f32 %v181, %v182
  %v184 = vrot.slane %v183, 1
  %v185 = vmax.f32 %v183, %v184
  %v186 = vsel %vm178, %v177, -inf
  %v187 = vrot.slane %v186, 4
  %v188 = vmax.f32 %v186, %v187
  %v189 = vrot.slane %v188, 2
  %v190 = vmax.f32 %v188, %v189
  %v191 = vrot.slane %v190, 1
  %v192 = vmax.f32 %v190, %v191
  %v193 = vsub.f32 %v176, %v185
  %v194 = vsub.f32 %v177, %v192
  %v195 = vmul.f32 %v193, 1.442695
  %v196 = vpow.pop %v195
  %v197 = vmul.f32 %v194, 1.442695
  %v198 = vpow.pop %v197
  %v199 = vmul.f32 %v196, %v27
  %v200 = vmul.f32 %v198, %v27
  %v201 = vsel %vm178, %v199, 0.0
  %v202 = vrot.slane %v201, 4
  %v203 = vadd.f32 %v201, %v202
  %v204 = vrot.slane %v203, 2
  %v205 = vadd.f32 %v203, %v204
  %v206 = vrot.slane %v205, 1
  %v207 = vadd.f32 %v205, %v206
  %v208 = vsel %vm178, %v200, 0.0
  %v209 = vrot.slane %v208, 4
  %v210 = vadd.f32 %v208, %v209
  %v211 = vrot.slane %v210, 2
  %v212 = vadd.f32 %v210, %v211
  %v213 = vrot.slane %v212, 1
  %v214 = vadd.f32 %v212, %v213
  %vm215 = vcmp.gt.f32.partialorder %v207, 0.0
  %vm216 = vcmp.gt.f32.partialorder %v214, 0.0
  %v217 = vsel %vm215, %v207, 1.0
  %v218 = vsel %vm216, %v214, 1.0
  %v219 = vrcp.pop %v217
  %v220 = vrcp.pop %v218
  %v221 = vmul.f32 %v199, %v219
  %v222 = vmul.f32 %v200, %v220
  %v223 = vlaneseq
  %v224 = vshrl.u32 %v223, 7
  %v225 = vadd.s32 %v224, 4
  %226 = vset.pattern.permute.xlu0 %v225
  %227 = vperm.xlu0 %226, %v29
  %v228 = vpop.permute.xlu0 %227
  %v229 = vmul.f32 %v36, %v228
  %v230 = vmul.f32 %v37, %v228
  %v231 = vadd.f32 %v229, 0.0
  %v232 = vadd.f32 %v230, 0.0
  %v233 = vlaneseq
  %v234 = vshrl.u32 %v233, 7
  %v235 = vadd.s32 %v234, 4
  %236 = vset.pattern.permute.xlu0 %v235
  %237 = vperm.xlu0 %236, %v42
  %v238 = vpop.permute.xlu0 %237
  %v239 = vmul.f32 %v49, %v238
  %v240 = vmul.f32 %v50, %v238
  %v241 = vadd.f32 %v231, %v239
  %v242 = vadd.f32 %v232, %v240
  %v243 = vlaneseq
  %v244 = vshrl.u32 %v243, 7
  %v245 = vadd.s32 %v244, 4
  %246 = vset.pattern.permute.xlu0 %v245
  %247 = vperm.xlu0 %246, %v55
  %v248 = vpop.permute.xlu0 %247
  %v249 = vmul.f32 %v62, %v248
  %v250 = vmul.f32 %v63, %v248
  %v251 = vadd.f32 %v241, %v249
  %v252 = vadd.f32 %v242, %v250
  %v253 = vlaneseq
  %v254 = vshrl.u32 %v253, 7
  %v255 = vadd.s32 %v254, 4
  %256 = vset.pattern.permute.xlu0 %v255
  %257 = vperm.xlu0 %256, %v68
  %v258 = vpop.permute.xlu0 %257
  %v259 = vmul.f32 %v75, %v258
  %v260 = vmul.f32 %v76, %v258
  %v261 = vadd.f32 %v251, %v259
  %v262 = vadd.f32 %v252, %v260
  %v263 = vlaneseq
  %v264 = vshrl.u32 %v263, 7
  %v265 = vadd.s32 %v264, 4
  %266 = vset.pattern.permute.xlu0 %v265
  %267 = vperm.xlu0 %266, %v81
  %v268 = vpop.permute.xlu0 %267
  %v269 = vmul.f32 %v88, %v268
  %v270 = vmul.f32 %v89, %v268
  %v271 = vadd.f32 %v261, %v269
  %v272 = vadd.f32 %v262, %v270
  %v273 = vlaneseq
  %v274 = vshrl.u32 %v273, 7
  %v275 = vadd.s32 %v274, 4
  %276 = vset.pattern.permute.xlu0 %v275
  %277 = vperm.xlu0 %276, %v94
  %v278 = vpop.permute.xlu0 %277
  %v279 = vmul.f32 %v101, %v278
  %v280 = vmul.f32 %v102, %v278
  %v281 = vadd.f32 %v271, %v279
  %v282 = vadd.f32 %v272, %v280
  %v283 = vperm.slane %v26, 1
  %v284 = vlaneseq
  %v285 = vshrl.u32 %v284, 7
  %287 = vset.pattern.permute.xlu0 %v285
  %288 = vperm.xlu0 %287, %v283
  %v289 = vpop.permute.xlu0 %288
  %v290 = vmul.f32 %v281, %v289
  %v291 = vmul.f32 %v282, %v289
  %v292 = vsel %vm116, %v290, 0.0
  %v293 = vrot.slane %v292, 4
  %v294 = vadd.f32 %v292, %v293
  %v295 = vrot.slane %v294, 2
  %v296 = vadd.f32 %v294, %v295
  %v297 = vrot.slane %v296, 1
  %v298 = vadd.f32 %v296, %v297
  %v299 = vsel %vm116, %v291, 0.0
  %v300 = vrot.slane %v299, 4
  %v301 = vadd.f32 %v299, %v300
  %v302 = vrot.slane %v301, 2
  %v303 = vadd.f32 %v301, %v302
  %v304 = vrot.slane %v303, 1
  %v305 = vadd.f32 %v303, %v304
  %v306 = vlaneseq
  %v307 = vshrl.u32 %v306, 7
  %v308 = vadd.s32 %v307, 4
  %309 = vset.pattern.permute.xlu0 %v308
  %310 = vperm.xlu0 %309, %v283
  %v311 = vpop.permute.xlu0 %310
  %v312 = vmul.f32 %v281, %v311
  %v313 = vmul.f32 %v282, %v311
  %v314 = vsel %vm116, %v312, 0.0
  %v315 = vrot.slane %v314, 4
  %v316 = vadd.f32 %v314, %v315
  %v317 = vrot.slane %v316, 2
  %v318 = vadd.f32 %v316, %v317
  %v319 = vrot.slane %v318, 1
  %v320 = vadd.f32 %v318, %v319
  %v321 = vsel %vm116, %v313, 0.0
  %v322 = vrot.slane %v321, 4
  %v323 = vadd.f32 %v321, %v322
  %v324 = vrot.slane %v323, 2
  %v325 = vadd.f32 %v323, %v324
  %v326 = vrot.slane %v325, 1
  %v327 = vadd.f32 %v325, %v326
  %v328 = vlaneseq
  %v329 = vshrl.u32 %v328, 7
  %331 = vset.pattern.permute.xlu0 %v329
  %332 = vperm.xlu0 %331, %v320
  %v333 = vpop.permute.xlu0 %332
  %v334 = vlaneseq
  %v335 = vshrl.u32 %v334, 7
  %337 = vset.pattern.permute.xlu0 %v335
  %338 = vperm.xlu0 %337, %v327
  %v339 = vpop.permute.xlu0 %338
  %v340 = vadd.f32 %v333, %v298
  %v341 = vadd.f32 %v339, %v305
  %vm342 = vcmp.gt.f32.partialorder %v340, 0.0
  %vm343 = vcmp.gt.f32.partialorder %v341, 0.0
  %v344 = vmul.f32 %v340, 0.2
  %v345 = vmul.f32 %v341, 0.2
  %v346 = vsel %vm342, %v340, %v344
  %v347 = vsel %vm343, %v341, %v345
  %v348 = vsel %vm175, %v346, -1e+30
  %v349 = vsel %vm175, %v347, -1e+30
  %v350 = vsel %vm178, %v348, -inf
  %v351 = vrot.slane %v350, 4
  %v352 = vmax.f32 %v350, %v351
  %v353 = vrot.slane %v352, 2
  %v354 = vmax.f32 %v352, %v353
  %v355 = vrot.slane %v354, 1
  %v356 = vmax.f32 %v354, %v355
  %v357 = vsel %vm178, %v349, -inf
  %v358 = vrot.slane %v357, 4
  %v359 = vmax.f32 %v357, %v358
  %v360 = vrot.slane %v359, 2
  %v361 = vmax.f32 %v359, %v360
  %v362 = vrot.slane %v361, 1
  %v363 = vmax.f32 %v361, %v362
  %v364 = vsub.f32 %v348, %v356
  %v365 = vsub.f32 %v349, %v363
  %v366 = vmul.f32 %v364, 1.442695
  %v367 = vpow.pop %v366
  %v368 = vmul.f32 %v365, 1.442695
  %v369 = vpow.pop %v368
  %v370 = vmul.f32 %v367, %v27
  %v371 = vmul.f32 %v369, %v27
  %v372 = vsel %vm178, %v370, 0.0
  %v373 = vrot.slane %v372, 4
  %v374 = vadd.f32 %v372, %v373
  %v375 = vrot.slane %v374, 2
  %v376 = vadd.f32 %v374, %v375
  %v377 = vrot.slane %v376, 1
  %v378 = vadd.f32 %v376, %v377
  %v379 = vsel %vm178, %v371, 0.0
  %v380 = vrot.slane %v379, 4
  %v381 = vadd.f32 %v379, %v380
  %v382 = vrot.slane %v381, 2
  %v383 = vadd.f32 %v381, %v382
  %v384 = vrot.slane %v383, 1
  %v385 = vadd.f32 %v383, %v384
  %vm386 = vcmp.gt.f32.partialorder %v378, 0.0
  %vm387 = vcmp.gt.f32.partialorder %v385, 0.0
  %v388 = vsel %vm386, %v378, 1.0
  %v389 = vsel %vm387, %v385, 1.0
  %v390 = vrcp.pop %v388
  %v391 = vrcp.pop %v389
  %v392 = vmul.f32 %v370, %v390
  %v393 = vmul.f32 %v371, %v391
  %v395 = vsel %vm178, %v281, 0
  %397 = vmatpush.msra.mxu0 0.0
  %398 = vmatpush.msra.mxu0 0.0
  %399 = vmatpush.msra.mxu0 0.0
  %400 = vmatpush.msra.mxu0 0.0
  %401 = vmatpush.msra.mxu0 0.0
  %402 = vmatpush.msra.mxu0 0.0
  %403 = vmatpush.msra.mxu0 0.0
  %404 = vmatpush.msra.mxu0 0.0
  %405 = vmatpush.msra.mxu0 0.0
  %406 = vmatpush.msra.mxu0 0.0
  %407 = vmatpush.msra.mxu0 0.0
  %408 = vmatpush.msra.mxu0 0.0
  %409 = vmatpush.msra.mxu0 0.0
  %410 = vmatpush.msra.mxu0 0.0
  %411 = vmatpush.msra.mxu0 0.0
  %412 = vmatpush.msra.mxu0 %v392
  %413 = vmatmul.f32.gmra.mxu0 %v395
  %v414 = vpop.f32.mrf.mxu0
  %v415 = vadd.f32 0.0, %v414
  %416 = vdwg.mxu0
  %v418 = vsel %vm178, %v282, 0
  %420 = vmatpush.msra.mxu0 0.0
  %421 = vmatpush.msra.mxu0 0.0
  %422 = vmatpush.msra.mxu0 0.0
  %423 = vmatpush.msra.mxu0 0.0
  %424 = vmatpush.msra.mxu0 0.0
  %425 = vmatpush.msra.mxu0 0.0
  %426 = vmatpush.msra.mxu0 0.0
  %427 = vmatpush.msra.mxu0 0.0
  %428 = vmatpush.msra.mxu0 0.0
  %429 = vmatpush.msra.mxu0 0.0
  %430 = vmatpush.msra.mxu0 0.0
  %431 = vmatpush.msra.mxu0 0.0
  %432 = vmatpush.msra.mxu0 0.0
  %433 = vmatpush.msra.mxu0 0.0
  %434 = vmatpush.msra.mxu0 0.0
  %435 = vmatpush.msra.mxu0 %v393
  %436 = vmatmul.f32.gmra.mxu0 %v418
  %v437 = vpop.f32.mrf.mxu0
  %v438 = vadd.f32 0.0, %v437
  %439 = vdwg.mxu0
  %v441 = vsel %vm178, %v105, 0
  %443 = vmatpush.msra.mxu0 0.0
  %444 = vmatpush.msra.mxu0 0.0
  %445 = vmatpush.msra.mxu0 0.0
  %446 = vmatpush.msra.mxu0 0.0
  %447 = vmatpush.msra.mxu0 0.0
  %448 = vmatpush.msra.mxu0 0.0
  %449 = vmatpush.msra.mxu0 0.0
  %450 = vmatpush.msra.mxu0 0.0
  %451 = vmatpush.msra.mxu0 0.0
  %452 = vmatpush.msra.mxu0 0.0
  %453 = vmatpush.msra.mxu0 0.0
  %454 = vmatpush.msra.mxu0 0.0
  %455 = vmatpush.msra.mxu0 0.0
  %456 = vmatpush.msra.mxu0 0.0
  %457 = vmatpush.msra.mxu0 0.0
  %458 = vmatpush.msra.mxu0 %v221
  %459 = vmatmul.f32.gmra.mxu0 %v441
  %v460 = vpop.f32.mrf.mxu0
  %v461 = vadd.f32 %v415, %v460
  %462 = vdwg.mxu0
  %v464 = vsel %vm178, %v106, 0
  %466 = vmatpush.msra.mxu0 0.0
  %467 = vmatpush.msra.mxu0 0.0
  %468 = vmatpush.msra.mxu0 0.0
  %469 = vmatpush.msra.mxu0 0.0
  %470 = vmatpush.msra.mxu0 0.0
  %471 = vmatpush.msra.mxu0 0.0
  %472 = vmatpush.msra.mxu0 0.0
  %473 = vmatpush.msra.mxu0 0.0
  %474 = vmatpush.msra.mxu0 0.0
  %475 = vmatpush.msra.mxu0 0.0
  %476 = vmatpush.msra.mxu0 0.0
  %477 = vmatpush.msra.mxu0 0.0
  %478 = vmatpush.msra.mxu0 0.0
  %479 = vmatpush.msra.mxu0 0.0
  %480 = vmatpush.msra.mxu0 0.0
  %481 = vmatpush.msra.mxu0 %v222
  %482 = vmatmul.f32.gmra.mxu0 %v464
  %v483 = vpop.f32.mrf.mxu0
  %v484 = vadd.f32 %v438, %v483
  %485 = vdwg.mxu0
  %v486 = vmul.f32 %v28, 0.5
  %v488 = vperm.slane %v486, 0
  %v490 = vmul.f32 %v461, %v488
  %v491 = vmul.f32 %v484, %v488
  %v492 = vld [vmem:[%s3] sm:$0xf]
  %494 = vset.pattern.permute.xlu0 0
  %495 = vperm.xlu0 %494, %v492
  %v496 = vpop.permute.xlu0 %495
  %v498 = vadd.f32 %v490, %v496
  %v499 = vadd.f32 %v491, %v496
  %vm500 = vcmp.gt.f32.partialorder %v498, 0.0
  %vm501 = vcmp.gt.f32.partialorder %v499, 0.0
  %v502 = vmul.f32 %v498, 0.01
  %v503 = vmul.f32 %v499, 0.01
  %v504 = vsel %vm500, %v498, %v502
  %v505 = vsel %vm501, %v499, %v503
  %506 = vst.msk [vmem:[%s6] sm:$0xf] %vm116, %v504
  %507 = vst.msk [vmem:[%s6 + $0x4] sm:$0xf] %vm116, %v505
  // Predicated region
  $region26: #{net_forward.6} parent=0 // pred_check
    _
  $region27: #{net_forward.6} parent=0 // pred_check_branch
    %509 = sbr.rel (0) target = $region29
  $region28: #{net_forward.6} parent=0 // pred_region
    _
  $region29: #{net_forward.6} parent=0 // pred_fallthru
    _
  // Predicated region
  $region30: #{net_forward.6} parent=0 // pred_check
    _
  $region31: #{net_forward.6} parent=0 // pred_check_branch
    %511 = sbr.rel (0) target = $region33
  $region32: #{net_forward.6} parent=0 // pred_region
    _
  $region33: #{net_forward.6} parent=0 // pred_fallthru
    _

</llo_original>
